<compile_context>
chip_gen: v6e
topology: v6e:2x2x1
jax: 0.10.0
libtpu: 0.0.40
codegen_flags: <defaults>
</compile_context>

<pallas_src>
import jax
import jax.numpy as jnp
from jax import lax
from jax.experimental import pallas as pl
from jax.experimental.pallas import tpu as pltpu

BN_EPS = 1e-3  # eps=0.001 in the module


def _monores_kernel(x_ref, w_ref, par_ref, out_ref, lhs_ref):
    """One grid step processes Nb batch elements.

    x_ref   : (Nb, D, H, WC) f32   lane-packed input, WC = W*C (multiple of 128)
    w_ref   : (9*WC, WC) bf16      kw-folded block-banded conv weights, K-merged
    par_ref : (8, WC) f32          rows 0..3 = BN scale, BN shift, PReLU alpha, conv bias
    out_ref : (Nb, D, H, WC) f32
    lhs_ref : (Nb, D, H, 9*WC) bf16 VMEM scratch — matmul LHS (shifted taps)
    """
    Nb, D, H, WC = x_ref.shape
    M = Nb * D * H
    KW = w_ref.shape[0]  # 9 * WC

    # ---- Dropout (inactive -> identity), BatchNorm (folded), PReLU, in f32
    # (v5e has no bf16 VPU; elementwise math stays f32 on all targets).
    scale = par_ref[0:1, :]
    shift = par_ref[1:2, :]
    alpha = par_ref[2:3, :]
    x2 = x_ref[...].reshape(M, WC)
    y = x2 * scale + shift
    y = jnp.where(y > 0.0, y, alpha * y)

    # Row index within each H-plane (for masking the rolled halo rows).
    h_idx = lax.broadcasted_iota(jnp.int32, (M, WC), 0) % H

    # ---- Build the (M, 9*WC) matmul operand in VMEM scratch.
    # Column block j = kd*3 + kh holds y shifted by (kd-1, kh-1) in (D, H) with
    # zero padding.  H shift: sublane roll (XLU) + one-row mask.  D shift:
    # aligned leading-axis plane slices (one full 8-row plane per step).
    for kh in range(3):
        if kh == 0:                     # needs y[h-1]; zero row h == 0
            v = jnp.where(h_idx != 0, pltpu.roll(y, 1, 0), 0.0)
        elif kh == 1:
            v = y
        else:                           # needs y[h+1]; zero row h == H-1
            v = jnp.where(h_idx != H - 1, pltpu.roll(y, M - 1, 0), 0.0)  # M-1 ≡ -1
        # Single bf16 cast per kh variant (3 total, was 9 in v2).
        v = v.astype(jnp.bfloat16).reshape(Nb, D, H, WC)

        for kd in range(3):
            j = kd * 3 + kh
            col = slice(j * WC, (j + 1) * WC)
            if kd == 0:                 # needs y[d-1]; zero plane d == 0
                lhs_ref[:, 0:1, :, col] = jnp.zeros((Nb, 1, H, WC), jnp.bfloat16)
                lhs_ref[:, 1:D, :, col] = v[:, 0:D - 1]
            elif kd == 1:
                lhs_ref[:, :, :, col] = v
            else:                       # needs y[d+1]; zero plane d == D-1
                lhs_ref[:, 0:D - 1, :, col] = v[:, 1:D]
                lhs_ref[:, D - 1:D, :, col] = jnp.zeros((Nb, 1, H, WC), jnp.bfloat16)

    # ---- 3x3x3 conv as ONE MXU matmul: (M, 9*WC) x (9*WC, WC), f32 accumulation.
    acc = jnp.dot(lhs_ref[...].reshape(M, KW), w_ref[...],
                  preferred_element_type=jnp.float32)

    # ---- Conv bias + residual (x re-read from VMEM: short live ranges).
    out = acc + par_ref[3:4, :] + x_ref[...].reshape(M, WC)
    out_ref[...] = out.reshape(Nb, D, H, WC).astype(out_ref.dtype)


def prepare_monores_params(params, W):
    """One-time, per-layer parameter preparation (hoisted off the per-call path).

    Folds eval-mode BatchNorm into scale/shift, tiles per-channel vectors over
    the (w, c) lane packing into one (8, W*C) array, and builds the kw-folded
    block-banded conv weights merged along K into a (9*W*C, W*C) bf16 matrix.
    """
    gamma, beta, rmean, rvar, alpha, conv_w, conv_b = params
    C = int(gamma.shape[0])
    WC = W * C

    scale = gamma / jnp.sqrt(rvar + BN_EPS)
    shift = beta - rmean * scale
    rows = jnp.stack([jnp.tile(v, W) for v in (scale, shift, alpha, conv_b)])
    par = jnp.concatenate([rows, jnp.zeros((4, WC), jnp.float32)], axis=0)  # (8, WC)

    # Block-banded weights folding the kw taps (and the W zero padding) into the
    # contraction, then all 9 (kd,kh) taps merged along K:
    #   w_merged[(kd*3+kh)*WC + w_in*C + ci, w_out*C + co]
    #     = conv_w[co, ci, kd, kh, w_in - w_out + 1]    (zero outside the band)
    wt = jnp.transpose(conv_w, (2, 3, 4, 1, 0))          # (kd, kh, kw, Cin, Cout)
    band = jnp.zeros((3, 3, W, C, W, C), jnp.float32)
    for kw in range(3):
        for w_out in range(W):
            w_in = w_out + kw - 1
            if 0 <= w_in < W:
                band = band.at[:, :, w_in, :, w_out, :].set(wt[:, :, kw])
    w_merged = band.reshape(9 * WC, WC).astype(jnp.bfloat16)
    return w_merged, par


def pack_ncdhw(x_ncdhw):
    """(N, C, D, H, W) -> lane-packed (N, D, H, W*C), packed index = w*C + c."""
    N, C, D, H, W = x_ncdhw.shape
    return jnp.transpose(x_ncdhw, (0, 2, 3, 4, 1)).reshape(N, D, H, W * C)


def unpack_ncdhw(x_packed, C):
    """Lane-packed (N, D, H, W*C) -> (N, C, D, H, W)."""
    N, D, H, WC = x_packed.shape
    W = WC // C
    return jnp.transpose(x_packed.reshape(N, D, H, W, C), (0, 4, 1, 2, 3))


def monores_forward_packed(x_packed, w_merged, par, *, batch_per_step=None):
    """MonoRes forward on lane-packed activations (N, D, H, W*C) float32."""
    N, D, H, WC = x_packed.shape
    assert WC % 128 == 0, (
        "MonoRes Pallas kernel assumes the lane-packed W*C dim is a multiple "
        f"of 128 (got W*C={WC}); repack W/C or generalize the band layout.")
    assert w_merged.shape == (9 * WC, WC) and par.shape == (8, WC)

    # Batch elements per grid step: fold the batch into the matmul M to fill
    # the MXU and amortize per-step overhead; keep >=2 parallel grid steps only
    # when that still leaves M = nb*D*H >= 256 (v7x has 2 TensorCores; v5e/v6e
    # have 1, where a single fat step is best).
    if batch_per_step is None:
        nb = N
        half = (N + 1) // 2
        if N >= 2 and half * D * H >= 256:
            nb = half
        while N % nb:
            nb -= 1
    else:
        nb = int(batch_per_step)
        assert N % nb == 0, "batch_per_step must divide the batch size"
    grid = (N // nb,)

    # VMEM budget: in/out blocks (double-buffered), weights, params, LHS scratch.
    blk_io = nb * D * H * WC * 4
    vmem_est = (4 * blk_io
                + 2 * (9 * WC * WC * 2)
                + 2 * (8 * WC * 4)
                + nb * D * H * 9 * WC * 2)
    # Raise above the 16 MiB v5e scoped default; cap at 64 MiB (v7x physical).
    vmem_limit = int(min(64 << 20, max(32 << 20, 2 * vmem_est)))

    grid_spec = pltpu.PrefetchScalarGridSpec(
        num_scalar_prefetch=0,
        grid=grid,
        in_specs=[
            pl.BlockSpec((nb, D, H, WC), lambda n: (n, 0, 0, 0)),
            pl.BlockSpec((9 * WC, WC), lambda n: (0, 0)),
            pl.BlockSpec((8, WC), lambda n: (0, 0)),
        ],
        out_specs=pl.BlockSpec((nb, D, H, WC), lambda n: (n, 0, 0, 0)),
        scratch_shapes=[pltpu.VMEM((nb, D, H, 9 * WC), jnp.bfloat16)],
    )

    return pl.pallas_call(
        _monores_kernel,
        out_shape=jax.ShapeDtypeStruct((N, D, H, WC), x_packed.dtype),
        grid_spec=grid_spec,
        compiler_params=pltpu.CompilerParams(
            dimension_semantics=("parallel",),
            vmem_limit_bytes=vmem_limit),
    )(x_packed, w_merged, par)


def monores_forward(x_ncdhw, params, *, batch_per_step=None):
    """Convenience NCDHW entry point.

    For chains of MonoRes blocks, call prepare_monores_params() once per layer
    and keep activations in the lane-packed (N, D, H, W*C) layout between
    blocks (monores_forward_packed); the NCDHW<->packed transposes here each
    round-trip the activation through HBM.
    """
    C = x_ncdhw.shape[1]
    W = x_ncdhw.shape[-1]
    w_merged, par = prepare_monores_params(params, W)
    out_p = monores_forward_packed(pack_ncdhw(x_ncdhw), w_merged, par,
                                   batch_per_step=batch_per_step)
    return unpack_ncdhw(out_p, C)


def monores_reference(x, params, conv_operand_dtype=None):
    """Pure-JAX reference (NCDHW), mirrors the PyTorch forward in eval mode.

    With conv_operand_dtype=jnp.bfloat16 the conv operands are rounded the way
    the kernel feeds the MXU (bf16 inputs, f32 accumulation).
    """
    gamma, beta, rmean, rvar, alpha, conv_w, conv_b = params
    C = x.shape[1]
    sh = (1, C, 1, 1, 1)
    xn = (x - rmean.reshape(sh)) * (gamma.reshape(sh) /
                                    jnp.sqrt(rvar.reshape(sh) + BN_EPS)) + beta.reshape(sh)
    y = jnp.where(xn > 0, xn, alpha.reshape(sh) * xn)
    w = conv_w
    if conv_operand_dtype is None:
        precision = lax.Precision.HIGHEST
    else:
        y = y.astype(conv_operand_dtype)
        w = w.astype(conv_operand_dtype)
        precision = None
    conv = lax.conv_general_dilated(
        y, w, window_strides=(1, 1, 1), padding="SAME",
        dimension_numbers=("NCDHW", "OIDHW", "NCDHW"),
        preferred_element_type=jnp.float32,
        precision=precision)
    return conv + conv_b.reshape(sh) + x


if __name__ == "__main__":
    # Small shapes consistent with MonoRes(num_ch=16, ndims=3); W*C = 128.
    N, C, D, H, W = 2, 16, 8, 8, 8
    key = jax.random.PRNGKey(0)
    kx, kg, kb, km, kv, kw_, kcb = jax.random.split(key, 7)

    x = jax.random.normal(kx, (N, C, D, H, W), jnp.float32)
    gamma = 1.0 + 0.1 * jax.random.normal(kg, (C,), jnp.float32)     # BN weight
    beta = 0.1 * jax.random.normal(kb, (C,), jnp.float32)            # BN bias
    rmean = 0.1 * jax.random.normal(km, (C,), jnp.float32)           # BN running_mean
    rvar = 1.0 + 0.2 * jax.random.uniform(kv, (C,), jnp.float32)     # BN running_var
    alpha = 0.25 * jnp.ones((C,), jnp.float32)  # PReLU slope (module init=0.0; nonzero here)
    conv_w = 0.1 * jax.random.normal(kw_, (C, C, 3, 3, 3), jnp.float32)
    conv_b = 0.1 * jax.random.normal(kcb, (C,), jnp.float32)
    params = (gamma, beta, rmean, rvar, alpha, conv_w, conv_b)

    # One-time per-layer prep, hoisted off the per-call path.
    w_merged, par = jax.block_until_ready(prepare_monores_params(params, W))

    @jax.jit
    def run(x_ncdhw, w_merged, par):
        xp = pack_ncdhw(x_ncdhw)
        out_p = monores_forward_packed(xp, w_merged, par)
        return unpack_ncdhw(out_p, C)

    out = jax.block_until_ready(run(x, w_merged, par))

    # Structural check: reference fed the same bf16-rounded conv operands
    # (remaining differences are f32 accumulation order only).
    ref_q = monores_reference(x, params, conv_operand_dtype=jnp.bfloat16)
    err_q = float(jnp.max(jnp.abs(out - ref_q)))
    assert err_q < 1e-2, f"structural max abs error {err_q}"

    # End-to-end check vs the full-f32 reference; the difference is bf16
    # rounding of the conv operands only (kernel accumulates in f32).
    ref = monores_reference(x, params)
    err = float(jnp.max(jnp.abs(out - ref)))
    assert err < 5e-2, f"max abs error {err}"

    print("KERNEL_OK")
</pallas_src>

<mosaic_0001>
module attributes {stable_mosaic.version = 11 : i64} {
  func.func @_monores_kernel(%arg0: i32, %arg1: memref<2x8x8x128xf32, #tpu.memory_space<vmem>>, %arg2: memref<1152x128xbf16, #tpu.memory_space<vmem>>, %arg3: memref<8x128xf32, #tpu.memory_space<vmem>>, %arg4: memref<2x8x8x128xf32, #tpu.memory_space<vmem>>, %arg5: memref<2x8x8x1152xbf16, #tpu.memory_space<vmem>>) attributes {dimension_semantics = [#tpu.dimension_semantics<parallel>], iteration_bounds = array<i64: 1>, scalar_prefetch = 0 : i64, scratch_operands = 1 : i64, tpu.core_type = #tpu.core_type<tc>, window_params = [{transform_indices = @transform_0, window_bounds = array<i64: 2, 8, 8, 128>}, {pipeline_mode = #tpu.pipeline_mode<synchronous>, transform_indices = @transform_1, window_bounds = array<i64: 1152, 128>}, {pipeline_mode = #tpu.pipeline_mode<synchronous>, transform_indices = @transform_2, window_bounds = array<i64: 8, 128>}, {transform_indices = @transform_3, window_bounds = array<i64: 2, 8, 8, 128>}]} {
    %c0 = arith.constant 0 : index
    %c0_0 = arith.constant 0 : index
    %0 = vector.load %arg3[%c0, %c0_0] : memref<8x128xf32, #tpu.memory_space<vmem>>, vector<1x128xf32>
    %c1 = arith.constant 1 : index
    %c0_1 = arith.constant 0 : index
    %1 = vector.load %arg3[%c1, %c0_1] : memref<8x128xf32, #tpu.memory_space<vmem>>, vector<1x128xf32>
    %c2 = arith.constant 2 : index
    %c0_2 = arith.constant 0 : index
    %2 = vector.load %arg3[%c2, %c0_2] : memref<8x128xf32, #tpu.memory_space<vmem>>, vector<1x128xf32>
    %c0_3 = arith.constant 0 : index
    %c0_4 = arith.constant 0 : index
    %c0_5 = arith.constant 0 : index
    %c0_6 = arith.constant 0 : index
    %3 = vector.load %arg1[%c0_3, %c0_4, %c0_5, %c0_6] : memref<2x8x8x128xf32, #tpu.memory_space<vmem>>, vector<2x8x8x128xf32>
    %4 = vector.shape_cast %3 : vector<2x8x8x128xf32> to vector<128x128xf32>
    %5 = vector.broadcast %0 : vector<1x128xf32> to vector<128x128xf32>
    %6 = arith.mulf %4, %5 : vector<128x128xf32>
    %7 = vector.broadcast %1 : vector<1x128xf32> to vector<128x128xf32>
    %8 = arith.addf %6, %7 : vector<128x128xf32>
    %cst = arith.constant 0.000000e+00 : f32
    %9 = vector.broadcast %cst : f32 to vector<128x128xf32>
    %10 = arith.cmpf ogt, %8, %9 : vector<128x128xf32>
    %11 = vector.broadcast %2 : vector<1x128xf32> to vector<128x128xf32>
    %12 = arith.mulf %11, %8 : vector<128x128xf32>
    %13 = arith.select %10, %8, %12 : vector<128x128xi1>, vector<128x128xf32>
    %14 = tpu.iota {dimensions = array<i32: 0>} : vector<128x128xi32>
    %c8_i32 = arith.constant 8 : i32
    %c0_i32 = arith.constant 0 : i32
    %15 = arith.cmpi eq, %c8_i32, %c0_i32 : i32
    %c1_i32 = arith.constant 1 : i32
    %16 = arith.select %15, %c1_i32, %c8_i32 : i32
    %17 = vector.broadcast %16 : i32 to vector<128x128xi32>
    %18 = arith.remsi %14, %17 : vector<128x128xi32>
    %c0_i32_7 = arith.constant 0 : i32
    %19 = vector.broadcast %c0_i32_7 : i32 to vector<128x128xi32>
    %20 = arith.cmpi ne, %18, %19 : vector<128x128xi32>
    %c0_i32_8 = arith.constant 0 : i32
    %21 = vector.broadcast %c0_i32_8 : i32 to vector<128x128xi32>
    %22 = arith.cmpi slt, %18, %21 : vector<128x128xi32>
    %c0_i32_9 = arith.constant 0 : i32
    %23 = arith.cmpi slt, %16, %c0_i32_9 : i32
    %24 = vector.broadcast %23 : i1 to vector<128x128xi1>
    %25 = vector.broadcast %24 : vector<128x128xi1> to vector<128x128xi1>
    %26 = arith.xori %22, %25 : vector<128x128xi1>
    %27 = arith.andi %26, %20 : vector<128x128xi1>
    %28 = vector.broadcast %16 : i32 to vector<128x128xi32>
    %29 = arith.addi %18, %28 : vector<128x128xi32>
    %30 = arith.select %27, %29, %18 : vector<128x128xi1>, vector<128x128xi32>
    %c0_i32_10 = arith.constant 0 : i32
    %31 = vector.broadcast %c0_i32_10 : i32 to vector<128x128xi32>
    %32 = arith.cmpi ne, %30, %31 : vector<128x128xi32>
    %c1_i32_11 = arith.constant 1 : i32
    %33 = tpu.dynamic_rotate %13 by %c1_i32_11 dim 0 : vector<128x128xf32>, i32 -> vector<128x128xf32>
    %cst_12 = arith.constant 0.000000e+00 : f32
    %34 = vector.broadcast %cst_12 : f32 to vector<128x128xf32>
    %35 = arith.select %32, %33, %34 : vector<128x128xi1>, vector<128x128xf32>
    %36 = arith.truncf %35 : vector<128x128xf32> to vector<128x128xbf16>
    %37 = vector.shape_cast %36 : vector<128x128xbf16> to vector<2x8x8x128xbf16>
    %cst_13 = arith.constant 0.000000e+00 : bf16
    %38 = vector.broadcast %cst_13 : bf16 to vector<2x1x8x128xbf16>
    %c0_14 = arith.constant 0 : index
    %c0_15 = arith.constant 0 : index
    %c0_16 = arith.constant 0 : index
    %c0_17 = arith.constant 0 : index
    %39 = vector.load %arg5[%c0_14, %c0_15, %c0_16, %c0_17] : memref<2x8x8x1152xbf16, #tpu.memory_space<vmem>>, vector<2x1x8x128xbf16>
    tpu.vector_store %arg5[%c0_14, %c0_15, %c0_16, %c0_17], %38 {strides = array<i32>} : memref<2x8x8x1152xbf16, #tpu.memory_space<vmem>>, vector<2x1x8x128xbf16>,
    %40 = vector.extract_strided_slice %37 {offsets = [0, 0, 0, 0], sizes = [2, 7, 8, 128], strides = [1, 1, 1, 1]} : vector<2x8x8x128xbf16> to vector<2x7x8x128xbf16>
    %c0_18 = arith.constant 0 : index
    %c1_19 = arith.constant 1 : index
    %c0_20 = arith.constant 0 : index
    %c0_21 = arith.constant 0 : index
    %41 = vector.load %arg5[%c0_18, %c1_19, %c0_20, %c0_21] : memref<2x8x8x1152xbf16, #tpu.memory_space<vmem>>, vector<2x7x8x128xbf16>
    tpu.vector_store %arg5[%c0_18, %c1_19, %c0_20, %c0_21], %40 {strides = array<i32>} : memref<2x8x8x1152xbf16, #tpu.memory_space<vmem>>, vector<2x7x8x128xbf16>,
    %c0_22 = arith.constant 0 : index
    %c0_23 = arith.constant 0 : index
    %c0_24 = arith.constant 0 : index
    %c384 = arith.constant 384 : index
    %42 = vector.load %arg5[%c0_22, %c0_23, %c0_24, %c384] : memref<2x8x8x1152xbf16, #tpu.memory_space<vmem>>, vector<2x8x8x128xbf16>
    tpu.vector_store %arg5[%c0_22, %c0_23, %c0_24, %c384], %37 {strides = array<i32>} : memref<2x8x8x1152xbf16, #tpu.memory_space<vmem>>, vector<2x8x8x128xbf16>,
    %43 = vector.extract_strided_slice %37 {offsets = [0, 1, 0, 0], sizes = [2, 7, 8, 128], strides = [1, 1, 1, 1]} : vector<2x8x8x128xbf16> to vector<2x7x8x128xbf16>
    %c0_25 = arith.constant 0 : index
    %c0_26 = arith.constant 0 : index
    %c0_27 = arith.constant 0 : index
    %c768 = arith.constant 768 : index
    %44 = vector.load %arg5[%c0_25, %c0_26, %c0_27, %c768] : memref<2x8x8x1152xbf16, #tpu.memory_space<vmem>>, vector<2x7x8x128xbf16>
    tpu.vector_store %arg5[%c0_25, %c0_26, %c0_27, %c768], %43 {strides = array<i32>} : memref<2x8x8x1152xbf16, #tpu.memory_space<vmem>>, vector<2x7x8x128xbf16>,
    %cst_28 = arith.constant 0.000000e+00 : bf16
    %45 = vector.broadcast %cst_28 : bf16 to vector<2x1x8x128xbf16>
    %c0_29 = arith.constant 0 : index
    %c7 = arith.constant 7 : index
    %c0_30 = arith.constant 0 : index
    %c768_31 = arith.constant 768 : index
    %46 = vector.load %arg5[%c0_29, %c7, %c0_30, %c768_31] : memref<2x8x8x1152xbf16, #tpu.memory_space<vmem>>, vector<2x1x8x128xbf16>
    tpu.vector_store %arg5[%c0_29, %c7, %c0_30, %c768_31], %45 {strides = array<i32>} : memref<2x8x8x1152xbf16, #tpu.memory_space<vmem>>, vector<2x1x8x128xbf16>,
    %47 = arith.truncf %13 : vector<128x128xf32> to vector<128x128xbf16>
    %48 = vector.shape_cast %47 : vector<128x128xbf16> to vector<2x8x8x128xbf16>
    %cst_32 = arith.constant 0.000000e+00 : bf16
    %49 = vector.broadcast %cst_32 : bf16 to vector<2x1x8x128xbf16>
    %c0_33 = arith.constant 0 : index
    %c0_34 = arith.constant 0 : index
    %c0_35 = arith.constant 0 : index
    %c128 = arith.constant 128 : index
    %50 = vector.load %arg5[%c0_33, %c0_34, %c0_35, %c128] : memref<2x8x8x1152xbf16, #tpu.memory_space<vmem>>, vector<2x1x8x128xbf16>
    tpu.vector_store %arg5[%c0_33, %c0_34, %c0_35, %c128], %49 {strides = array<i32>} : memref<2x8x8x1152xbf16, #tpu.memory_space<vmem>>, vector<2x1x8x128xbf16>,
    %51 = vector.extract_strided_slice %48 {offsets = [0, 0, 0, 0], sizes = [2, 7, 8, 128], strides = [1, 1, 1, 1]} : vector<2x8x8x128xbf16> to vector<2x7x8x128xbf16>
    %c0_36 = arith.constant 0 : index
    %c1_37 = arith.constant 1 : index
    %c0_38 = arith.constant 0 : index
    %c128_39 = arith.constant 128 : index
    %52 = vector.load %arg5[%c0_36, %c1_37, %c0_38, %c128_39] : memref<2x8x8x1152xbf16, #tpu.memory_space<vmem>>, vector<2x7x8x128xbf16>
    tpu.vector_store %arg5[%c0_36, %c1_37, %c0_38, %c128_39], %51 {strides = array<i32>} : memref<2x8x8x1152xbf16, #tpu.memory_space<vmem>>, vector<2x7x8x128xbf16>,
    %c0_40 = arith.constant 0 : index
    %c0_41 = arith.constant 0 : index
    %c0_42 = arith.constant 0 : index
    %c512 = arith.constant 512 : index
    %53 = vector.load %arg5[%c0_40, %c0_41, %c0_42, %c512] : memref<2x8x8x1152xbf16, #tpu.memory_space<vmem>>, vector<2x8x8x128xbf16>
    tpu.vector_store %arg5[%c0_40, %c0_41, %c0_42, %c512], %48 {strides = array<i32>} : memref<2x8x8x1152xbf16, #tpu.memory_space<vmem>>, vector<2x8x8x128xbf16>,
    %54 = vector.extract_strided_slice %48 {offsets = [0, 1, 0, 0], sizes = [2, 7, 8, 128], strides = [1, 1, 1, 1]} : vector<2x8x8x128xbf16> to vector<2x7x8x128xbf16>
    %c0_43 = arith.constant 0 : index
    %c0_44 = arith.constant 0 : index
    %c0_45 = arith.constant 0 : index
    %c896 = arith.constant 896 : index
    %55 = vector.load %arg5[%c0_43, %c0_44, %c0_45, %c896] : memref<2x8x8x1152xbf16, #tpu.memory_space<vmem>>, vector<2x7x8x128xbf16>
    tpu.vector_store %arg5[%c0_43, %c0_44, %c0_45, %c896], %54 {strides = array<i32>} : memref<2x8x8x1152xbf16, #tpu.memory_space<vmem>>, vector<2x7x8x128xbf16>,
    %cst_46 = arith.constant 0.000000e+00 : bf16
    %56 = vector.broadcast %cst_46 : bf16 to vector<2x1x8x128xbf16>
    %c0_47 = arith.constant 0 : index
    %c7_48 = arith.constant 7 : index
    %c0_49 = arith.constant 0 : index
    %c896_50 = arith.constant 896 : index
    %57 = vector.load %arg5[%c0_47, %c7_48, %c0_49, %c896_50] : memref<2x8x8x1152xbf16, #tpu.memory_space<vmem>>, vector<2x1x8x128xbf16>
    tpu.vector_store %arg5[%c0_47, %c7_48, %c0_49, %c896_50], %56 {strides = array<i32>} : memref<2x8x8x1152xbf16, #tpu.memory_space<vmem>>, vector<2x1x8x128xbf16>,
    %c7_i32 = arith.constant 7 : i32
    %58 = vector.broadcast %c7_i32 : i32 to vector<128x128xi32>
    %59 = arith.cmpi ne, %30, %58 : vector<128x128xi32>
    %c127_i32 = arith.constant 127 : i32
    %60 = tpu.dynamic_rotate %13 by %c127_i32 dim 0 : vector<128x128xf32>, i32 -> vector<128x128xf32>
    %cst_51 = arith.constant 0.000000e+00 : f32
    %61 = vector.broadcast %cst_51 : f32 to vector<128x128xf32>
    %62 = arith.select %59, %60, %61 : vector<128x128xi1>, vector<128x128xf32>
    %63 = arith.truncf %62 : vector<128x128xf32> to vector<128x128xbf16>
    %64 = vector.shape_cast %63 : vector<128x128xbf16> to vector<2x8x8x128xbf16>
    %cst_52 = arith.constant 0.000000e+00 : bf16
    %65 = vector.broadcast %cst_52 : bf16 to vector<2x1x8x128xbf16>
    %c0_53 = arith.constant 0 : index
    %c0_54 = arith.constant 0 : index
    %c0_55 = arith.constant 0 : index
    %c256 = arith.constant 256 : index
    %66 = vector.load %arg5[%c0_53, %c0_54, %c0_55, %c256] : memref<2x8x8x1152xbf16, #tpu.memory_space<vmem>>, vector<2x1x8x128xbf16>
    tpu.vector_store %arg5[%c0_53, %c0_54, %c0_55, %c256], %65 {strides = array<i32>} : memref<2x8x8x1152xbf16, #tpu.memory_space<vmem>>, vector<2x1x8x128xbf16>,
    %67 = vector.extract_strided_slice %64 {offsets = [0, 0, 0, 0], sizes = [2, 7, 8, 128], strides = [1, 1, 1, 1]} : vector<2x8x8x128xbf16> to vector<2x7x8x128xbf16>
    %c0_56 = arith.constant 0 : index
    %c1_57 = arith.constant 1 : index
    %c0_58 = arith.constant 0 : index
    %c256_59 = arith.constant 256 : index
    %68 = vector.load %arg5[%c0_56, %c1_57, %c0_58, %c256_59] : memref<2x8x8x1152xbf16, #tpu.memory_space<vmem>>, vector<2x7x8x128xbf16>
    tpu.vector_store %arg5[%c0_56, %c1_57, %c0_58, %c256_59], %67 {strides = array<i32>} : memref<2x8x8x1152xbf16, #tpu.memory_space<vmem>>, vector<2x7x8x128xbf16>,
    %c0_60 = arith.constant 0 : index
    %c0_61 = arith.constant 0 : index
    %c0_62 = arith.constant 0 : index
    %c640 = arith.constant 640 : index
    %69 = vector.load %arg5[%c0_60, %c0_61, %c0_62, %c640] : memref<2x8x8x1152xbf16, #tpu.memory_space<vmem>>, vector<2x8x8x128xbf16>
    tpu.vector_store %arg5[%c0_60, %c0_61, %c0_62, %c640], %64 {strides = array<i32>} : memref<2x8x8x1152xbf16, #tpu.memory_space<vmem>>, vector<2x8x8x128xbf16>,
    %70 = vector.extract_strided_slice %64 {offsets = [0, 1, 0, 0], sizes = [2, 7, 8, 128], strides = [1, 1, 1, 1]} : vector<2x8x8x128xbf16> to vector<2x7x8x128xbf16>
    %c0_63 = arith.constant 0 : index
    %c0_64 = arith.constant 0 : index
    %c0_65 = arith.constant 0 : index
    %c1024 = arith.constant 1024 : index
    %71 = vector.load %arg5[%c0_63, %c0_64, %c0_65, %c1024] : memref<2x8x8x1152xbf16, #tpu.memory_space<vmem>>, vector<2x7x8x128xbf16>
    tpu.vector_store %arg5[%c0_63, %c0_64, %c0_65, %c1024], %70 {strides = array<i32>} : memref<2x8x8x1152xbf16, #tpu.memory_space<vmem>>, vector<2x7x8x128xbf16>,
    %cst_66 = arith.constant 0.000000e+00 : bf16
    %72 = vector.broadcast %cst_66 : bf16 to vector<2x1x8x128xbf16>
    %c0_67 = arith.constant 0 : index
    %c7_68 = arith.constant 7 : index
    %c0_69 = arith.constant 0 : index
    %c1024_70 = arith.constant 1024 : index
    %73 = vector.load %arg5[%c0_67, %c7_68, %c0_69, %c1024_70] : memref<2x8x8x1152xbf16, #tpu.memory_space<vmem>>, vector<2x1x8x128xbf16>
    tpu.vector_store %arg5[%c0_67, %c7_68, %c0_69, %c1024_70], %72 {strides = array<i32>} : memref<2x8x8x1152xbf16, #tpu.memory_space<vmem>>, vector<2x1x8x128xbf16>,
    %c0_71 = arith.constant 0 : index
    %c0_72 = arith.constant 0 : index
    %c0_73 = arith.constant 0 : index
    %c0_74 = arith.constant 0 : index
    %74 = vector.load %arg5[%c0_71, %c0_72, %c0_73, %c0_74] : memref<2x8x8x1152xbf16, #tpu.memory_space<vmem>>, vector<2x8x8x1152xbf16>
    %75 = vector.shape_cast %74 : vector<2x8x8x1152xbf16> to vector<128x1152xbf16>
    %c0_75 = arith.constant 0 : index
    %c0_76 = arith.constant 0 : index
    %76 = vector.load %arg2[%c0_75, %c0_76] : memref<1152x128xbf16, #tpu.memory_space<vmem>>, vector<1152x128xbf16>
    %cst_77 = arith.constant dense<0.000000e+00> : vector<128x128xf32>
    %77 = tpu.matmul %75, %76, %cst_77 {dimension_numbers = #tpu.dot_dimension_numbers<[1], [0], [0], [1], [0, 0, 1, 1], [], []>} : vector<128x1152xbf16>, vector<1152x128xbf16>, vector<128x128xf32> -> vector<128x128xf32>
    %c3 = arith.constant 3 : index
    %c0_78 = arith.constant 0 : index
    %78 = vector.load %arg3[%c3, %c0_78] : memref<8x128xf32, #tpu.memory_space<vmem>>, vector<1x128xf32>
    %79 = vector.broadcast %78 : vector<1x128xf32> to vector<128x128xf32>
    %80 = arith.addf %77, %79 : vector<128x128xf32>
    %c0_79 = arith.constant 0 : index
    %c0_80 = arith.constant 0 : index
    %c0_81 = arith.constant 0 : index
    %c0_82 = arith.constant 0 : index
    %81 = vector.load %arg1[%c0_79, %c0_80, %c0_81, %c0_82] : memref<2x8x8x128xf32, #tpu.memory_space<vmem>>, vector<2x8x8x128xf32>
    %82 = vector.shape_cast %81 : vector<2x8x8x128xf32> to vector<128x128xf32>
    %83 = arith.addf %80, %82 : vector<128x128xf32>
    %84 = vector.shape_cast %83 : vector<128x128xf32> to vector<2x8x8x128xf32>
    %c0_83 = arith.constant 0 : index
    %c0_84 = arith.constant 0 : index
    %c0_85 = arith.constant 0 : index
    %c0_86 = arith.constant 0 : index
    %85 = vector.load %arg4[%c0_83, %c0_84, %c0_85, %c0_86] : memref<2x8x8x128xf32, #tpu.memory_space<vmem>>, vector<2x8x8x128xf32>
    tpu.vector_store %arg4[%c0_83, %c0_84, %c0_85, %c0_86], %84 {strides = array<i32>} : memref<2x8x8x128xf32, #tpu.memory_space<vmem>>, vector<2x8x8x128xf32>,
    return
  }
  func.func @transform_0(%arg0: i32) -> (i32, i32, i32, i32) {
    %c0_i32 = arith.constant 0 : i32
    %c0_i32_0 = arith.constant 0 : i32
    %c0_i32_1 = arith.constant 0 : i32
    %c0_i32_2 = arith.constant 0 : i32
    return %arg0, %c0_i32, %c0_i32_0, %c0_i32_1 : i32, i32, i32, i32
  }
  func.func @transform_1(%arg0: i32) -> (i32, i32) {
    %c0_i32 = arith.constant 0 : i32
    %c0_i32_0 = arith.constant 0 : i32
    %c0_i32_1 = arith.constant 0 : i32
    return %c0_i32, %c0_i32_0 : i32, i32
  }
  func.func @transform_2(%arg0: i32) -> (i32, i32) {
    %c0_i32 = arith.constant 0 : i32
    %c0_i32_0 = arith.constant 0 : i32
    %c0_i32_1 = arith.constant 0 : i32
    return %c0_i32, %c0_i32_0 : i32, i32
  }
  func.func @transform_3(%arg0: i32) -> (i32, i32, i32, i32) {
    %c0_i32 = arith.constant 0 : i32
    %c0_i32_0 = arith.constant 0 : i32
    %c0_i32_1 = arith.constant 0 : i32
    %c0_i32_2 = arith.constant 0 : i32
    return %arg0, %c0_i32, %c0_i32_0, %c0_i32_1 : i32, i32, i32, i32
  }
}

</mosaic_0001>

<llo_original>
// kernel: run.1
$region0: #{run.1}
  #allocation0 [shape = 'u32[]', space=smem, size = 0x4, offset = 0x4, fixed_abs, tag = 'smem constant byte address 0x4 - core index']
  #allocation1 [shape = 'u32[144,128]{1,0:T(1,128)}', space=vmem, size = 0x12000, scoped, tag = 'internal scratch']
  #allocation2 [shape = 'bf16[2,8,8,1152]{3,2,1,0:T(8,128)(2,1)}', space=vmem, size = 0x48000, scoped, tag = 'scratch operand']
  %s0 = inlined_call_operand.vmem [shape: f32[2,8,8,128], index: 0, kind: input, shape index: {}]
  %s1 = inlined_call_operand.vmem [shape: bf16[1152,128], index: 1, kind: input, shape index: {}]
  %s2 = inlined_call_operand.vmem [shape: f32[8,128], index: 2, kind: input, shape index: {}]
  %s3 = inlined_call_operand.vmem [shape: f32[2,8,8,128], index: 3, kind: output, shape index: {}]
  %s4 = sld [smem:[#allocation0]]
  $region22: #{run.1} parent=0
    _
  %s6 = ssub.s32 1, %s4
  %s7 = scalar_select 0, %s6, %s4
  // Predicated region
  $region2: #{run.1} parent=0 // pred_check
    _
  $region3: #{run.1} parent=0 // pred_check_branch
    %9 = sbr.rel (0) target = $region5
  $region4: #{run.1} parent=0 // pred_region
    _
  $region5: #{run.1} parent=0 // pred_fallthru
    _
  // Predicated region
  $region6: #{run.1} parent=0 // pred_check
    _
  $region7: #{run.1} parent=0 // pred_check_branch
    %11 = sbr.rel (0) target = $region9
  $region8: #{run.1} parent=0 // pred_region
    _
  $region9: #{run.1} parent=0 // pred_fallthru
    _
  // Predicated region
  $region10: #{run.1} parent=0 // pred_check
    _
  $region11: #{run.1} parent=0 // pred_check_branch
    %13 = sbr.rel (0) target = $region13
  $region12: #{run.1} parent=0 // pred_region
    _
  $region13: #{run.1} parent=0 // pred_fallthru
    _
  %v15 = vld [vmem:[%s2] sm:$0x1]
  %v16 = vld [vmem:[%s2 + $0x1] sm:$0x1]
  %v17 = vld [vmem:[%s2 + $0x2] sm:$0x1]
  %v18 = vld [vmem:[%s0] sm:$0xff]
  %v19 = vld [vmem:[%s0 + $0x8] sm:$0xff]
  %v20 = vld [vmem:[%s0 + $0x10] sm:$0xff]
  %v21 = vld [vmem:[%s0 + $0x18] sm:$0xff]
  %v22 = vld [vmem:[%s0 + $0x20] sm:$0xff]
  %v23 = vld [vmem:[%s0 + $0x28] sm:$0xff]
  %v24 = vld [vmem:[%s0 + $0x30] sm:$0xff]
  %v25 = vld [vmem:[%s0 + $0x38] sm:$0xff]
  %v26 = vld [vmem:[%s0 + $0x40] sm:$0xff]
  %v27 = vld [vmem:[%s0 + $0x48] sm:$0xff]
  %v28 = vld [vmem:[%s0 + $0x50] sm:$0xff]
  %v29 = vld [vmem:[%s0 + $0x58] sm:$0xff]
  %v30 = vld [vmem:[%s0 + $0x60] sm:$0xff]
  %v31 = vld [vmem:[%s0 + $0x68] sm:$0xff]
  %v32 = vld [vmem:[%s0 + $0x70] sm:$0xff]
  %v33 = vld [vmem:[%s0 + $0x78] sm:$0xff]
  %v34 = vlaneseq
  %v35 = vshrl.u32 %v34, 7
  %v36 = vsub.s32 0, %v35
  %v37 = vrot.slane %v15, %v36
  %v38 = vmul.f32 %v18, %v37
  %v39 = vmul.f32 %v19, %v37
  %v40 = vmul.f32 %v20, %v37
  %v41 = vmul.f32 %v21, %v37
  %v42 = vmul.f32 %v22, %v37
  %v43 = vmul.f32 %v23, %v37
  %v44 = vmul.f32 %v24, %v37
  %v45 = vmul.f32 %v25, %v37
  %v46 = vmul.f32 %v26, %v37
  %v47 = vmul.f32 %v27, %v37
  %v48 = vmul.f32 %v28, %v37
  %v49 = vmul.f32 %v29, %v37
  %v50 = vmul.f32 %v30, %v37
  %v51 = vmul.f32 %v31, %v37
  %v52 = vmul.f32 %v32, %v37
  %v53 = vmul.f32 %v33, %v37
  %v54 = vlaneseq
  %v55 = vshrl.u32 %v54, 7
  %v56 = vsub.s32 0, %v55
  %v57 = vrot.slane %v16, %v56
  %v58 = vadd.f32 %v38, %v57
  %v59 = vadd.f32 %v39, %v57
  %v60 = vadd.f32 %v40, %v57
  %v61 = vadd.f32 %v41, %v57
  %v62 = vadd.f32 %v42, %v57
  %v63 = vadd.f32 %v43, %v57
  %v64 = vadd.f32 %v44, %v57
  %v65 = vadd.f32 %v45, %v57
  %v66 = vadd.f32 %v46, %v57
  %v67 = vadd.f32 %v47, %v57
  %v68 = vadd.f32 %v48, %v57
  %v69 = vadd.f32 %v49, %v57
  %v70 = vadd.f32 %v50, %v57
  %v71 = vadd.f32 %v51, %v57
  %v72 = vadd.f32 %v52, %v57
  %v73 = vadd.f32 %v53, %v57
  %vm74 = vcmp.gt.f32.partialorder %v58, 0.0
  %vm75 = vcmp.gt.f32.partialorder %v59, 0.0
  %vm76 = vcmp.gt.f32.partialorder %v60, 0.0
  %vm77 = vcmp.gt.f32.partialorder %v61, 0.0
  %vm78 = vcmp.gt.f32.partialorder %v62, 0.0
  %vm79 = vcmp.gt.f32.partialorder %v63, 0.0
  %vm80 = vcmp.gt.f32.partialorder %v64, 0.0
  %vm81 = vcmp.gt.f32.partialorder %v65, 0.0
  %vm82 = vcmp.gt.f32.partialorder %v66, 0.0
  %vm83 = vcmp.gt.f32.partialorder %v67, 0.0
  %vm84 = vcmp.gt.f32.partialorder %v68, 0.0
  %vm85 = vcmp.gt.f32.partialorder %v69, 0.0
  %vm86 = vcmp.gt.f32.partialorder %v70, 0.0
  %vm87 = vcmp.gt.f32.partialorder %v71, 0.0
  %vm88 = vcmp.gt.f32.partialorder %v72, 0.0
  %vm89 = vcmp.gt.f32.partialorder %v73, 0.0
  %v90 = vlaneseq
  %v91 = vshrl.u32 %v90, 7
  %v92 = vsub.s32 0, %v91
  %v93 = vrot.slane %v17, %v92
  %v94 = vmul.f32 %v93, %v58
  %v95 = vmul.f32 %v93, %v59
  %v96 = vmul.f32 %v93, %v60
  %v97 = vmul.f32 %v93, %v61
  %v98 = vmul.f32 %v93, %v62
  %v99 = vmul.f32 %v93, %v63
  %v100 = vmul.f32 %v93, %v64
  %v101 = vmul.f32 %v93, %v65
  %v102 = vmul.f32 %v93, %v66
  %v103 = vmul.f32 %v93, %v67
  %v104 = vmul.f32 %v93, %v68
  %v105 = vmul.f32 %v93, %v69
  %v106 = vmul.f32 %v93, %v70
  %v107 = vmul.f32 %v93, %v71
  %v108 = vmul.f32 %v93, %v72
  %v109 = vmul.f32 %v93, %v73
  %v110 = vsel %vm74, %v58, %v94
  %v111 = vsel %vm75, %v59, %v95
  %v112 = vsel %vm76, %v60, %v96
  %v113 = vsel %vm77, %v61, %v97
  %v114 = vsel %vm78, %v62, %v98
  %v115 = vsel %vm79, %v63, %v99
  %v116 = vsel %vm80, %v64, %v100
  %v117 = vsel %vm81, %v65, %v101
  %v118 = vsel %vm82, %v66, %v102
  %v119 = vsel %vm83, %v67, %v103
  %v120 = vsel %vm84, %v68, %v104
  %v121 = vsel %vm85, %v69, %v105
  %v122 = vsel %vm86, %v70, %v106
  %v123 = vsel %vm87, %v71, %v107
  %v124 = vsel %vm88, %v72, %v108
  %v125 = vsel %vm89, %v73, %v109
  %v126 = vlaneseq
  %v127 = vshrl.u32 %v126, 7
  %v128 = vadd.s32 %v127, 8
  %v129 = vadd.s32 %v127, 16
  %v130 = vadd.s32 %v127, 24
  %v131 = vadd.s32 %v127, 32
  %v132 = vadd.s32 %v127, 40
  %v133 = vadd.s32 %v127, 48
  %v134 = vadd.s32 %v127, 56
  %v135 = vadd.s32 %v127, 64
  %v136 = vadd.s32 %v127, 72
  %v137 = vadd.s32 %v127, 80
  %v138 = vadd.s32 %v127, 88
  %v139 = vadd.s32 %v127, 96
  %v140 = vadd.s32 %v127, 104
  %v141 = vadd.s32 %v127, 112
  %v142 = vadd.s32 %v127, 120
  %vm143 = vcmp.lt.s32.totalorder %v127, 0
  %v144 = vsub.s32 0, %v127
  %v145 = vsel %vm143, %v144, %v127
  %v146 = vshrl.u32 %v145, 3
  %v147 = vand.u32 %v145, 7
  %v148 = vsub.s32 0, %v147
  %v149 = vsel %vm143, %v148, %v147
  %vm150 = vcmp.lt.s32.totalorder %v128, 0
  %v151 = vsub.s32 0, %v128
  %v152 = vsel %vm150, %v151, %v128
  %v153 = vshrl.u32 %v152, 3
  %v154 = vand.u32 %v152, 7
  %v155 = vsub.s32 0, %v154
  %v156 = vsel %vm150, %v155, %v154
  %vm157 = vcmp.lt.s32.totalorder %v129, 0
  %v158 = vsub.s32 0, %v129
  %v159 = vsel %vm157, %v158, %v129
  %v160 = vshrl.u32 %v159, 3
  %v161 = vand.u32 %v159, 7
  %v162 = vsub.s32 0, %v161
  %v163 = vsel %vm157, %v162, %v161
  %vm164 = vcmp.lt.s32.totalorder %v130, 0
  %v165 = vsub.s32 0, %v130
  %v166 = vsel %vm164, %v165, %v130
  %v167 = vshrl.u32 %v166, 3
  %v168 = vand.u32 %v166, 7
  %v169 = vsub.s32 0, %v168
  %v170 = vsel %vm164, %v169, %v168
  %vm171 = vcmp.lt.s32.totalorder %v131, 0
  %v172 = vsub.s32 0, %v131
  %v173 = vsel %vm171, %v172, %v131
  %v174 = vshrl.u32 %v173, 3
  %v175 = vand.u32 %v173, 7
  %v176 = vsub.s32 0, %v175
  %v177 = vsel %vm171, %v176, %v175
  %vm178 = vcmp.lt.s32.totalorder %v132, 0
  %v179 = vsub.s32 0, %v132
  %v180 = vsel %vm178, %v179, %v132
  %v181 = vshrl.u32 %v180, 3
  %v182 = vand.u32 %v180, 7
  %v183 = vsub.s32 0, %v182
  %v184 = vsel %vm178, %v183, %v182
  %vm185 = vcmp.lt.s32.totalorder %v133, 0
  %v186 = vsub.s32 0, %v133
  %v187 = vsel %vm185, %v186, %v133
  %v188 = vshrl.u32 %v187, 3
  %v189 = vand.u32 %v187, 7
  %v190 = vsub.s32 0, %v189
  %v191 = vsel %vm185, %v190, %v189
  %vm192 = vcmp.lt.s32.totalorder %v134, 0
  %v193 = vsub.s32 0, %v134
  %v194 = vsel %vm192, %v193, %v134
  %v195 = vshrl.u32 %v194, 3
  %v196 = vand.u32 %v194, 7
  %v197 = vsub.s32 0, %v196
  %v198 = vsel %vm192, %v197, %v196
  %vm199 = vcmp.lt.s32.totalorder %v135, 0
  %v200 = vsub.s32 0, %v135
  %v201 = vsel %vm199, %v200, %v135
  %v202 = vshrl.u32 %v201, 3
  %v203 = vand.u32 %v201, 7
  %v204 = vsub.s32 0, %v203
  %v205 = vsel %vm199, %v204, %v203
  %vm206 = vcmp.lt.s32.totalorder %v136, 0
  %v207 = vsub.s32 0, %v136
  %v208 = vsel %vm206, %v207, %v136
  %v209 = vshrl.u32 %v208, 3
  %v210 = vand.u32 %v208, 7
  %v211 = vsub.s32 0, %v210
  %v212 = vsel %vm206, %v211, %v210
  %vm213 = vcmp.lt.s32.totalorder %v137, 0
  %v214 = vsub.s32 0, %v137
  %v215 = vsel %vm213, %v214, %v137
  %v216 = vshrl.u32 %v215, 3
  %v217 = vand.u32 %v215, 7
  %v218 = vsub.s32 0, %v217
  %v219 = vsel %vm213, %v218, %v217
  %vm220 = vcmp.lt.s32.totalorder %v138, 0
  %v221 = vsub.s32 0, %v138
  %v222 = vsel %vm220, %v221, %v138
  %v223 = vshrl.u32 %v222, 3
  %v224 = vand.u32 %v222, 7
  %v225 = vsub.s32 0, %v224
  %v226 = vsel %vm220, %v225, %v224
  %vm227 = vcmp.lt.s32.totalorder %v139, 0
  %v228 = vsub.s32 0, %v139
  %v229 = vsel %vm227, %v228, %v139
  %v230 = vshrl.u32 %v229, 3
  %v231 = vand.u32 %v229, 7
  %v232 = vsub.s32 0, %v231
  %v233 = vsel %vm227, %v232, %v231
  %vm234 = vcmp.lt.s32.totalorder %v140, 0
  %v235 = vsub.s32 0, %v140
  %v236 = vsel %vm234, %v235, %v140
  %v237 = vshrl.u32 %v236, 3
  %v238 = vand.u32 %v236, 7
  %v239 = vsub.s32 0, %v238
  %v240 = vsel %vm234, %v239, %v238
  %vm241 = vcmp.lt.s32.totalorder %v141, 0
  %v242 = vsub.s32 0, %v141
  %v243 = vsel %vm241, %v242, %v141
  %v244 = vshrl.u32 %v243, 3
  %v245 = vand.u32 %v243, 7
  %v246 = vsub.s32 0, %v245
  %v247 = vsel %vm241, %v246, %v245
  %vm248 = vcmp.lt.s32.totalorder %v142, 0
  %v249 = vsub.s32 0, %v142
  %v250 = vsel %vm248, %v249, %v142
  %v251 = vshrl.u32 %v250, 3
  %v252 = vand.u32 %v250, 7
  %v253 = vsub.s32 0, %v252
  %v254 = vsel %vm248, %v253, %v252
  %vm255 = vcmp.ne.s32.totalorder %v149, 0
  %vm256 = vcmp.ne.s32.totalorder %v156, 0
  %vm257 = vcmp.ne.s32.totalorder %v163, 0
  %vm258 = vcmp.ne.s32.totalorder %v170, 0
  %vm259 = vcmp.ne.s32.totalorder %v177, 0
  %vm260 = vcmp.ne.s32.totalorder %v184, 0
  %vm261 = vcmp.ne.s32.totalorder %v191, 0
  %vm262 = vcmp.ne.s32.totalorder %v198, 0
  %vm263 = vcmp.ne.s32.totalorder %v205, 0
  %vm264 = vcmp.ne.s32.totalorder %v212, 0
  %vm265 = vcmp.ne.s32.totalorder %v219, 0
  %vm266 = vcmp.ne.s32.totalorder %v226, 0
  %vm267 = vcmp.ne.s32.totalorder %v233, 0
  %vm268 = vcmp.ne.s32.totalorder %v240, 0
  %vm269 = vcmp.ne.s32.totalorder %v247, 0
  %vm270 = vcmp.ne.s32.totalorder %v254, 0
  %vm271 = vcmp.lt.s32.totalorder %v149, 0
  %vm272 = vcmp.lt.s32.totalorder %v156, 0
  %vm273 = vcmp.lt.s32.totalorder %v163, 0
  %vm274 = vcmp.lt.s32.totalorder %v170, 0
  %vm275 = vcmp.lt.s32.totalorder %v177, 0
  %vm276 = vcmp.lt.s32.totalorder %v184, 0
  %vm277 = vcmp.lt.s32.totalorder %v191, 0
  %vm278 = vcmp.lt.s32.totalorder %v198, 0
  %vm279 = vcmp.lt.s32.totalorder %v205, 0
  %vm280 = vcmp.lt.s32.totalorder %v212, 0
  %vm281 = vcmp.lt.s32.totalorder %v219, 0
  %vm282 = vcmp.lt.s32.totalorder %v226, 0
  %vm283 = vcmp.lt.s32.totalorder %v233, 0
  %vm284 = vcmp.lt.s32.totalorder %v240, 0
  %vm285 = vcmp.lt.s32.totalorder %v247, 0
  %vm286 = vcmp.lt.s32.totalorder %v254, 0
  %vm287 = vmand %vm271, %vm255
  %vm288 = vmand %vm272, %vm256
  %vm289 = vmand %vm273, %vm257
  %vm290 = vmand %vm274, %vm258
  %vm291 = vmand %vm275, %vm259
  %vm292 = vmand %vm276, %vm260
  %vm293 = vmand %vm277, %vm261
  %vm294 = vmand %vm278, %vm262
  %vm295 = vmand %vm279, %vm263
  %vm296 = vmand %vm280, %vm264
  %vm297 = vmand %vm281, %vm265
  %vm298 = vmand %vm282, %vm266
  %vm299 = vmand %vm283, %vm267
  %vm300 = vmand %vm284, %vm268
  %vm301 = vmand %vm285, %vm269
  %vm302 = vmand %vm286, %vm270
  %v303 = vadd.s32 %v149, 8
  %v304 = vadd.s32 %v156, 8
  %v305 = vadd.s32 %v163, 8
  %v306 = vadd.s32 %v170, 8
  %v307 = vadd.s32 %v177, 8
  %v308 = vadd.s32 %v184, 8
  %v309 = vadd.s32 %v191, 8
  %v310 = vadd.s32 %v198, 8
  %v311 = vadd.s32 %v205, 8
  %v312 = vadd.s32 %v212, 8
  %v313 = vadd.s32 %v219, 8
  %v314 = vadd.s32 %v226, 8
  %v315 = vadd.s32 %v233, 8
  %v316 = vadd.s32 %v240, 8
  %v317 = vadd.s32 %v247, 8
  %v318 = vadd.s32 %v254, 8
  %v319 = vsel %vm287, %v303, %v149
  %v320 = vsel %vm288, %v304, %v156
  %v321 = vsel %vm289, %v305, %v163
  %v322 = vsel %vm290, %v306, %v170
  %v323 = vsel %vm291, %v307, %v177
  %v324 = vsel %vm292, %v308, %v184
  %v325 = vsel %vm293, %v309, %v191
  %v326 = vsel %vm294, %v310, %v198
  %v327 = vsel %vm295, %v311, %v205
  %v328 = vsel %vm296, %v312, %v212
  %v329 = vsel %vm297, %v313, %v219
  %v330 = vsel %vm298, %v314, %v226
  %v331 = vsel %vm299, %v315, %v233
  %v332 = vsel %vm300, %v316, %v240
  %v333 = vsel %vm301, %v317, %v247
  %v334 = vsel %vm302, %v318, %v254
  %vm335 = vcmp.ne.s32.totalorder %v319, 0
  %vm336 = vcmp.ne.s32.totalorder %v320, 0
  %vm337 = vcmp.ne.s32.totalorder %v321, 0
  %vm338 = vcmp.ne.s32.totalorder %v322, 0
  %vm339 = vcmp.ne.s32.totalorder %v323, 0
  %vm340 = vcmp.ne.s32.totalorder %v324, 0
  %vm341 = vcmp.ne.s32.totalorder %v325, 0
  %vm342 = vcmp.ne.s32.totalorder %v326, 0
  %vm343 = vcmp.ne.s32.totalorder %v327, 0
  %vm344 = vcmp.ne.s32.totalorder %v328, 0
  %vm345 = vcmp.ne.s32.totalorder %v329, 0
  %vm346 = vcmp.ne.s32.totalorder %v330, 0
  %vm347 = vcmp.ne.s32.totalorder %v331, 0
  %vm348 = vcmp.ne.s32.totalorder %v332, 0
  %vm349 = vcmp.ne.s32.totalorder %v333, 0
  %vm350 = vcmp.ne.s32.totalorder %v334, 0
  %v351 = vrot.slane %v110, 7
  %v352 = vrot.slane %v111, 7
  %v353 = vrot.slane %v112, 7
  %v354 = vrot.slane %v113, 7
  %v355 = vrot.slane %v114, 7
  %v356 = vrot.slane %v115, 7
  %v357 = vrot.slane %v116, 7
  %v358 = vrot.slane %v117, 7
  %v359 = vrot.slane %v118, 7
  %v360 = vrot.slane %v119, 7
  %v361 = vrot.slane %v120, 7
  %v362 = vrot.slane %v121, 7
  %v363 = vrot.slane %v122, 7
  %v364 = vrot.slane %v123, 7
  %v365 = vrot.slane %v124, 7
  %v366 = vrot.slane %v125, 7
  %vm367 = vcmp.lt.s32.totalorder %v127, 1
  %v368 = vsel %vm367, %v365, %v366
  %v369 = vsel %vm367, %v364, %v365
  %v370 = vsel %vm367, %v363, %v364
  %v371 = vsel %vm367, %v362, %v363
  %v372 = vsel %vm367, %v361, %v362
  %v373 = vsel %vm367, %v360, %v361
  %v374 = vsel %vm367, %v359, %v360
  %v375 = vsel %vm367, %v358, %v359
  %v376 = vsel %vm367, %v357, %v358
  %v377 = vsel %vm367, %v356, %v357
  %v378 = vsel %vm367, %v355, %v356
  %v379 = vsel %vm367, %v354, %v355
  %v380 = vsel %vm367, %v353, %v354
  %v381 = vsel %vm367, %v352, %v353
  %v382 = vsel %vm367, %v351, %v352
  %v383 = vsel %vm367, %v366, %v351
  %v384 = vsel %vm335, %v383, 0.0
  %v385 = vsel %vm336, %v382, 0.0
  %v386 = vsel %vm337, %v381, 0.0
  %v387 = vsel %vm338, %v380, 0.0
  %v388 = vsel %vm339, %v379, 0.0
  %v389 = vsel %vm340, %v378, 0.0
  %v390 = vsel %vm341, %v377, 0.0
  %v391 = vsel %vm342, %v376, 0.0
  %v392 = vsel %vm343, %v375, 0.0
  %v393 = vsel %vm344, %v374, 0.0
  %v394 = vsel %vm345, %v373, 0.0
  %v395 = vsel %vm346, %v372, 0.0
  %v396 = vsel %vm347, %v371, 0.0
  %v397 = vsel %vm348, %v370, 0.0
  %v398 = vsel %vm349, %v369, 0.0
  %v399 = vsel %vm350, %v368, 0.0
  %v400 = vpack.c.bf16 %v385, %v384
  %v401 = vpack.c.bf16 %v387, %v386
  %v402 = vpack.c.bf16 %v389, %v388
  %v403 = vpack.c.bf16 %v391, %v390
  %v404 = vpack.c.bf16 %v393, %v392
  %v405 = vpack.c.bf16 %v395, %v394
  %v406 = vpack.c.bf16 %v397, %v396
  %v407 = vpack.c.bf16 %v399, %v398
  %v416 = vunpack.c.l.b16 %v400
  %v417 = vunpack.c.h.b16 %v400
  %v418 = vunpack.c.l.b16 %v401
  %v419 = vunpack.c.h.b16 %v401
  %v420 = vunpack.c.l.b16 %v402
  %v421 = vunpack.c.h.b16 %v402
  %v422 = vunpack.c.l.b16 %v403
  %v423 = vunpack.c.h.b16 %v403
  %v424 = vunpack.c.l.b16 %v404
  %v425 = vunpack.c.h.b16 %v404
  %v426 = vunpack.c.l.b16 %v405
  %v427 = vunpack.c.h.b16 %v405
  %v428 = vunpack.c.l.b16 %v406
  %v429 = vunpack.c.h.b16 %v406
  %v430 = vunpack.c.l.b16 %v407
  %v431 = vunpack.c.h.b16 %v407
  %v432 = vpack.c.b16 %v416, %v416
  %v433 = vpack.c.b16 %v417, %v417
  %v434 = vpack.c.b16 %v418, %v418
  %v435 = vpack.c.b16 %v419, %v419
  %v436 = vpack.c.b16 %v420, %v420
  %v437 = vpack.c.b16 %v421, %v421
  %v438 = vpack.c.b16 %v422, %v422
  %v439 = vpack.c.b16 %v423, %v423
  %v440 = vpack.c.b16 %v424, %v424
  %v441 = vpack.c.b16 %v425, %v425
  %v442 = vpack.c.b16 %v426, %v426
  %v443 = vpack.c.b16 %v427, %v427
  %v444 = vpack.c.b16 %v428, %v428
  %v445 = vpack.c.b16 %v429, %v429
  %v446 = vpack.c.b16 %v430, %v430
  %v447 = vpack.c.b16 %v431, %v431
  %464 = vst [vmem:[#allocation2] sm:$0xf] 0
  %465 = vst [vmem:[#allocation2 + $0x120] sm:$0xf] 0
  %s466 = scalar_lea.vmem [#allocation2], 36
  %467 = vst [vmem:[%s466] sm:$0xf] %v432
  %468 = vst [vmem:[%s466 + $0x24] sm:$0xf] %v433
  %469 = vst [vmem:[%s466 + $0x48] sm:$0xf] %v434
  %470 = vst [vmem:[%s466 + $0x6c] sm:$0xf] %v435
  %471 = vst [vmem:[%s466 + $0x90] sm:$0xf] %v436
  %472 = vst [vmem:[%s466 + $0xb4] sm:$0xf] %v437
  %473 = vst [vmem:[%s466 + $0xd8] sm:$0xf] %v438
  %474 = vst [vmem:[%s466 + $0x120] sm:$0xf] %v440
  %475 = vst [vmem:[%s466 + $0x144] sm:$0xf] %v441
  %476 = vst [vmem:[%s466 + $0x168] sm:$0xf] %v442
  %477 = vst [vmem:[%s466 + $0x18c] sm:$0xf] %v443
  %478 = vst [vmem:[%s466 + $0x1b0] sm:$0xf] %v444
  %479 = vst [vmem:[%s466 + $0x1d4] sm:$0xf] %v445
  %480 = vst [vmem:[%s466 + $0x1f8] sm:$0xf] %v446
  %481 = vst [vmem:[#allocation2 + $0xc] sm:$0xf] %v432
  %482 = vst [vmem:[#allocation2 + $0x30] sm:$0xf] %v433
  %483 = vst [vmem:[#allocation2 + $0x54] sm:$0xf] %v434
  %484 = vst [vmem:[#allocation2 + $0x78] sm:$0xf] %v435
  %485 = vst [vmem:[#allocation2 + $0x9c] sm:$0xf] %v436
  %486 = vst [vmem:[#allocation2 + $0xc0] sm:$0xf] %v437
  %487 = vst [vmem:[#allocation2 + $0xe4] sm:$0xf] %v438
  %488 = vst [vmem:[#allocation2 + $0x108] sm:$0xf] %v439
  %489 = vst [vmem:[#allocation2 + $0x12c] sm:$0xf] %v440
  %490 = vst [vmem:[#allocation2 + $0x150] sm:$0xf] %v441
  %491 = vst [vmem:[#allocation2 + $0x174] sm:$0xf] %v442
  %492 = vst [vmem:[#allocation2 + $0x198] sm:$0xf] %v443
  %493 = vst [vmem:[#allocation2 + $0x1bc] sm:$0xf] %v444
  %494 = vst [vmem:[#allocation2 + $0x1e0] sm:$0xf] %v445
  %495 = vst [vmem:[#allocation2 + $0x204] sm:$0xf] %v446
  %496 = vst [vmem:[#allocation2 + $0x228] sm:$0xf] %v447
  %497 = vst [vmem:[#allocation2 + $0x18] sm:$0xf] %v433
  %498 = vst [vmem:[#allocation2 + $0x3c] sm:$0xf] %v434
  %499 = vst [vmem:[#allocation2 + $0x60] sm:$0xf] %v435
  %500 = vst [vmem:[#allocation2 + $0x84] sm:$0xf] %v436
  %501 = vst [vmem:[#allocation2 + $0xa8] sm:$0xf] %v437
  %502 = vst [vmem:[#allocation2 + $0xcc] sm:$0xf] %v438
  %503 = vst [vmem:[#allocation2 + $0xf0] sm:$0xf] %v439
  %504 = vst [vmem:[#allocation2 + $0x138] sm:$0xf] %v441
  %505 = vst [vmem:[#allocation2 + $0x15c] sm:$0xf] %v442
  %506 = vst [vmem:[#allocation2 + $0x180] sm:$0xf] %v443
  %507 = vst [vmem:[#allocation2 + $0x1a4] sm:$0xf] %v444
  %508 = vst [vmem:[#allocation2 + $0x1c8] sm:$0xf] %v445
  %509 = vst [vmem:[#allocation2 + $0x1ec] sm:$0xf] %v446
  %510 = vst [vmem:[#allocation2 + $0x210] sm:$0xf] %v447
  %s511 = scalar_lea.vmem [#allocation2], 252
  %512 = vst [vmem:[%s511 + $0x18] sm:$0xf] 0
  %513 = vst [vmem:[%s511 + $0x138] sm:$0xf] 0
  %v514 = vpack.c.bf16 %v111, %v110
  %v515 = vpack.c.bf16 %v113, %v112
  %v516 = vpack.c.bf16 %v115, %v114
  %v517 = vpack.c.bf16 %v117, %v116
  %v518 = vpack.c.bf16 %v119, %v118
  %v519 = vpack.c.bf16 %v121, %v120
  %v520 = vpack.c.bf16 %v123, %v122
  %v521 = vpack.c.bf16 %v125, %v124
  %v530 = vunpack.c.l.b16 %v514
  %v531 = vunpack.c.h.b16 %v514
  %v532 = vunpack.c.l.b16 %v515
  %v533 = vunpack.c.h.b16 %v515
  %v534 = vunpack.c.l.b16 %v516
  %v535 = vunpack.c.h.b16 %v516
  %v536 = vunpack.c.l.b16 %v517
  %v537 = vunpack.c.h.b16 %v517
  %v538 = vunpack.c.l.b16 %v518
  %v539 = vunpack.c.h.b16 %v518
  %v540 = vunpack.c.l.b16 %v519
  %v541 = vunpack.c.h.b16 %v519
  %v542 = vunpack.c.l.b16 %v520
  %v543 = vunpack.c.h.b16 %v520
  %v544 = vunpack.c.l.b16 %v521
  %v545 = vunpack.c.h.b16 %v521
  %v546 = vpack.c.b16 %v530, %v530
  %v547 = vpack.c.b16 %v531, %v531
  %v548 = vpack.c.b16 %v532, %v532
  %v549 = vpack.c.b16 %v533, %v533
  %v550 = vpack.c.b16 %v534, %v534
  %v551 = vpack.c.b16 %v535, %v535
  %v552 = vpack.c.b16 %v536, %v536
  %v553 = vpack.c.b16 %v537, %v537
  %v554 = vpack.c.b16 %v538, %v538
  %v555 = vpack.c.b16 %v539, %v539
  %v556 = vpack.c.b16 %v540, %v540
  %v557 = vpack.c.b16 %v541, %v541
  %v558 = vpack.c.b16 %v542, %v542
  %v559 = vpack.c.b16 %v543, %v543
  %v560 = vpack.c.b16 %v544, %v544
  %v561 = vpack.c.b16 %v545, %v545
  %578 = vst [vmem:[#allocation2 + $0x4] sm:$0xf] 0
  %579 = vst [vmem:[#allocation2 + $0x124] sm:$0xf] 0
  %580 = vst [vmem:[%s466 + $0x4] sm:$0xf] %v546
  %581 = vst [vmem:[%s466 + $0x28] sm:$0xf] %v547
  %582 = vst [vmem:[%s466 + $0x4c] sm:$0xf] %v548
  %583 = vst [vmem:[%s466 + $0x70] sm:$0xf] %v549
  %584 = vst [vmem:[%s466 + $0x94] sm:$0xf] %v550
  %585 = vst [vmem:[%s466 + $0xb8] sm:$0xf] %v551
  %586 = vst [vmem:[%s466 + $0xdc] sm:$0xf] %v552
  %587 = vst [vmem:[%s466 + $0x124] sm:$0xf] %v554
  %588 = vst [vmem:[%s466 + $0x148] sm:$0xf] %v555
  %589 = vst [vmem:[%s466 + $0x16c] sm:$0xf] %v556
  %590 = vst [vmem:[%s466 + $0x190] sm:$0xf] %v557
  %591 = vst [vmem:[%s466 + $0x1b4] sm:$0xf] %v558
  %592 = vst [vmem:[%s466 + $0x1d8] sm:$0xf] %v559
  %593 = vst [vmem:[%s466 + $0x1fc] sm:$0xf] %v560
  %594 = vst [vmem:[#allocation2 + $0x10] sm:$0xf] %v546
  %595 = vst [vmem:[#allocation2 + $0x34] sm:$0xf] %v547
  %596 = vst [vmem:[#allocation2 + $0x58] sm:$0xf] %v548
  %597 = vst [vmem:[#allocation2 + $0x7c] sm:$0xf] %v549
  %598 = vst [vmem:[#allocation2 + $0xa0] sm:$0xf] %v550
  %599 = vst [vmem:[#allocation2 + $0xc4] sm:$0xf] %v551
  %600 = vst [vmem:[#allocation2 + $0xe8] sm:$0xf] %v552
  %601 = vst [vmem:[#allocation2 + $0x10c] sm:$0xf] %v553
  %602 = vst [vmem:[#allocation2 + $0x130] sm:$0xf] %v554
  %603 = vst [vmem:[#allocation2 + $0x154] sm:$0xf] %v555
  %604 = vst [vmem:[#allocation2 + $0x178] sm:$0xf] %v556
  %605 = vst [vmem:[#allocation2 + $0x19c] sm:$0xf] %v557
  %606 = vst [vmem:[#allocation2 + $0x1c0] sm:$0xf] %v558
  %607 = vst [vmem:[#allocation2 + $0x1e4] sm:$0xf] %v559
  %608 = vst [vmem:[#allocation2 + $0x208] sm:$0xf] %v560
  %609 = vst [vmem:[#allocation2 + $0x22c] sm:$0xf] %v561
  %610 = vst [vmem:[#allocation2 + $0x1c] sm:$0xf] %v547
  %611 = vst [vmem:[#allocation2 + $0x40] sm:$0xf] %v548
  %612 = vst [vmem:[#allocation2 + $0x64] sm:$0xf] %v549
  %613 = vst [vmem:[#allocation2 + $0x88] sm:$0xf] %v550
  %614 = vst [vmem:[#allocation2 + $0xac] sm:$0xf] %v551
  %615 = vst [vmem:[#allocation2 + $0xd0] sm:$0xf] %v552
  %616 = vst [vmem:[#allocation2 + $0xf4] sm:$0xf] %v553
  %617 = vst [vmem:[#allocation2 + $0x13c] sm:$0xf] %v555
  %618 = vst [vmem:[#allocation2 + $0x160] sm:$0xf] %v556
  %619 = vst [vmem:[#allocation2 + $0x184] sm:$0xf] %v557
  %620 = vst [vmem:[#allocation2 + $0x1a8] sm:$0xf] %v558
  %621 = vst [vmem:[#allocation2 + $0x1cc] sm:$0xf] %v559
  %622 = vst [vmem:[#allocation2 + $0x1f0] sm:$0xf] %v560
  %623 = vst [vmem:[#allocation2 + $0x214] sm:$0xf] %v561
  %624 = vst [vmem:[%s511 + $0x1c] sm:$0xf] 0
  %625 = vst [vmem:[%s511 + $0x13c] sm:$0xf] 0
  %vm626 = vcmp.ne.s32.totalorder %v319, 7
  %vm627 = vcmp.ne.s32.totalorder %v320, 7
  %vm628 = vcmp.ne.s32.totalorder %v321, 7
  %vm629 = vcmp.ne.s32.totalorder %v322, 7
  %vm630 = vcmp.ne.s32.totalorder %v323, 7
  %vm631 = vcmp.ne.s32.totalorder %v324, 7
  %vm632 = vcmp.ne.s32.totalorder %v325, 7
  %vm633 = vcmp.ne.s32.totalorder %v326, 7
  %vm634 = vcmp.ne.s32.totalorder %v327, 7
  %vm635 = vcmp.ne.s32.totalorder %v328, 7
  %vm636 = vcmp.ne.s32.totalorder %v329, 7
  %vm637 = vcmp.ne.s32.totalorder %v330, 7
  %vm638 = vcmp.ne.s32.totalorder %v331, 7
  %vm639 = vcmp.ne.s32.totalorder %v332, 7
  %vm640 = vcmp.ne.s32.totalorder %v333, 7
  %vm641 = vcmp.ne.s32.totalorder %v334, 7
  %v642 = vrot.slane %v110, 1
  %v643 = vrot.slane %v111, 1
  %v644 = vrot.slane %v112, 1
  %v645 = vrot.slane %v113, 1
  %v646 = vrot.slane %v114, 1
  %v647 = vrot.slane %v115, 1
  %v648 = vrot.slane %v116, 1
  %v649 = vrot.slane %v117, 1
  %v650 = vrot.slane %v118, 1
  %v651 = vrot.slane %v119, 1
  %v652 = vrot.slane %v120, 1
  %v653 = vrot.slane %v121, 1
  %v654 = vrot.slane %v122, 1
  %v655 = vrot.slane %v123, 1
  %v656 = vrot.slane %v124, 1
  %v657 = vrot.slane %v125, 1
  %vm658 = vcmp.lt.s32.totalorder %v127, 7
  %v659 = vsel %vm658, %v656, %v657
  %v660 = vsel %vm658, %v655, %v656
  %v661 = vsel %vm658, %v654, %v655
  %v662 = vsel %vm658, %v653, %v654
  %v663 = vsel %vm658, %v652, %v653
  %v664 = vsel %vm658, %v651, %v652
  %v665 = vsel %vm658, %v650, %v651
  %v666 = vsel %vm658, %v649, %v650
  %v667 = vsel %vm658, %v648, %v649
  %v668 = vsel %vm658, %v647, %v648
  %v669 = vsel %vm658, %v646, %v647
  %v670 = vsel %vm658, %v645, %v646
  %v671 = vsel %vm658, %v644, %v645
  %v672 = vsel %vm658, %v643, %v644
  %v673 = vsel %vm658, %v642, %v643
  %v674 = vsel %vm658, %v657, %v642
  %v675 = vsel %vm626, %v673, 0.0
  %v676 = vsel %vm627, %v672, 0.0
  %v677 = vsel %vm628, %v671, 0.0
  %v678 = vsel %vm629, %v670, 0.0
  %v679 = vsel %vm630, %v669, 0.0
  %v680 = vsel %vm631, %v668, 0.0
  %v681 = vsel %vm632, %v667, 0.0
  %v682 = vsel %vm633, %v666, 0.0
  %v683 = vsel %vm634, %v665, 0.0
  %v684 = vsel %vm635, %v664, 0.0
  %v685 = vsel %vm636, %v663, 0.0
  %v686 = vsel %vm637, %v662, 0.0
  %v687 = vsel %vm638, %v661, 0.0
  %v688 = vsel %vm639, %v660, 0.0
  %v689 = vsel %vm640, %v659, 0.0
  %v690 = vsel %vm641, %v674, 0.0
  %v691 = vpack.c.bf16 %v676, %v675
  %v692 = vpack.c.bf16 %v678, %v677
  %v693 = vpack.c.bf16 %v680, %v679
  %v694 = vpack.c.bf16 %v682, %v681
  %v695 = vpack.c.bf16 %v684, %v683
  %v696 = vpack.c.bf16 %v686, %v685
  %v697 = vpack.c.bf16 %v688, %v687
  %v698 = vpack.c.bf16 %v690, %v689
  %v707 = vunpack.c.l.b16 %v691
  %v708 = vunpack.c.h.b16 %v691
  %v709 = vunpack.c.l.b16 %v692
  %v710 = vunpack.c.h.b16 %v692
  %v711 = vunpack.c.l.b16 %v693
  %v712 = vunpack.c.h.b16 %v693
  %v713 = vunpack.c.l.b16 %v694
  %v714 = vunpack.c.h.b16 %v694
  %v715 = vunpack.c.l.b16 %v695
  %v716 = vunpack.c.h.b16 %v695
  %v717 = vunpack.c.l.b16 %v696
  %v718 = vunpack.c.h.b16 %v696
  %v719 = vunpack.c.l.b16 %v697
  %v720 = vunpack.c.h.b16 %v697
  %v721 = vunpack.c.l.b16 %v698
  %v722 = vunpack.c.h.b16 %v698
  %v723 = vpack.c.b16 %v707, %v707
  %v724 = vpack.c.b16 %v708, %v708
  %v725 = vpack.c.b16 %v709, %v709
  %v726 = vpack.c.b16 %v710, %v710
  %v727 = vpack.c.b16 %v711, %v711
  %v728 = vpack.c.b16 %v712, %v712
  %v729 = vpack.c.b16 %v713, %v713
  %v730 = vpack.c.b16 %v714, %v714
  %v731 = vpack.c.b16 %v715, %v715
  %v732 = vpack.c.b16 %v716, %v716
  %v733 = vpack.c.b16 %v717, %v717
  %v734 = vpack.c.b16 %v718, %v718
  %v735 = vpack.c.b16 %v719, %v719
  %v736 = vpack.c.b16 %v720, %v720
  %v737 = vpack.c.b16 %v721, %v721
  %v738 = vpack.c.b16 %v722, %v722
  %755 = vst [vmem:[#allocation2 + $0x8] sm:$0xf] 0
  %756 = vst [vmem:[#allocation2 + $0x128] sm:$0xf] 0
  %757 = vst [vmem:[%s466 + $0x8] sm:$0xf] %v723
  %758 = vst [vmem:[%s466 + $0x2c] sm:$0xf] %v724
  %759 = vst [vmem:[%s466 + $0x50] sm:$0xf] %v725
  %760 = vst [vmem:[%s466 + $0x74] sm:$0xf] %v726
  %761 = vst [vmem:[%s466 + $0x98] sm:$0xf] %v727
  %762 = vst [vmem:[%s466 + $0xbc] sm:$0xf] %v728
  %763 = vst [vmem:[%s466 + $0xe0] sm:$0xf] %v729
  %764 = vst [vmem:[%s466 + $0x128] sm:$0xf] %v731
  %765 = vst [vmem:[%s466 + $0x14c] sm:$0xf] %v732
  %766 = vst [vmem:[%s466 + $0x170] sm:$0xf] %v733
  %767 = vst [vmem:[%s466 + $0x194] sm:$0xf] %v734
  %768 = vst [vmem:[%s466 + $0x1b8] sm:$0xf] %v735
  %769 = vst [vmem:[%s466 + $0x1dc] sm:$0xf] %v736
  %770 = vst [vmem:[%s466 + $0x200] sm:$0xf] %v737
  %771 = vst [vmem:[#allocation2 + $0x14] sm:$0xf] %v723
  %772 = vst [vmem:[#allocation2 + $0x38] sm:$0xf] %v724
  %773 = vst [vmem:[#allocation2 + $0x5c] sm:$0xf] %v725
  %774 = vst [vmem:[#allocation2 + $0x80] sm:$0xf] %v726
  %775 = vst [vmem:[#allocation2 + $0xa4] sm:$0xf] %v727
  %776 = vst [vmem:[#allocation2 + $0xc8] sm:$0xf] %v728
  %777 = vst [vmem:[#allocation2 + $0xec] sm:$0xf] %v729
  %778 = vst [vmem:[#allocation2 + $0x110] sm:$0xf] %v730
  %779 = vst [vmem:[#allocation2 + $0x134] sm:$0xf] %v731
  %780 = vst [vmem:[#allocation2 + $0x158] sm:$0xf] %v732
  %781 = vst [vmem:[#allocation2 + $0x17c] sm:$0xf] %v733
  %782 = vst [vmem:[#allocation2 + $0x1a0] sm:$0xf] %v734
  %783 = vst [vmem:[#allocation2 + $0x1c4] sm:$0xf] %v735
  %784 = vst [vmem:[#allocation2 + $0x1e8] sm:$0xf] %v736
  %785 = vst [vmem:[#allocation2 + $0x20c] sm:$0xf] %v737
  %786 = vst [vmem:[#allocation2 + $0x230] sm:$0xf] %v738
  %787 = vst [vmem:[#allocation2 + $0x20] sm:$0xf] %v724
  %788 = vst [vmem:[#allocation2 + $0x44] sm:$0xf] %v725
  %789 = vst [vmem:[#allocation2 + $0x68] sm:$0xf] %v726
  %790 = vst [vmem:[#allocation2 + $0x8c] sm:$0xf] %v727
  %791 = vst [vmem:[#allocation2 + $0xb0] sm:$0xf] %v728
  %792 = vst [vmem:[#allocation2 + $0xd4] sm:$0xf] %v729
  %793 = vst [vmem:[#allocation2 + $0xf8] sm:$0xf] %v730
  %794 = vst [vmem:[#allocation2 + $0x140] sm:$0xf] %v732
  %795 = vst [vmem:[#allocation2 + $0x164] sm:$0xf] %v733
  %796 = vst [vmem:[#allocation2 + $0x188] sm:$0xf] %v734
  %797 = vst [vmem:[#allocation2 + $0x1ac] sm:$0xf] %v735
  %798 = vst [vmem:[#allocation2 + $0x1d0] sm:$0xf] %v736
  %799 = vst [vmem:[#allocation2 + $0x1f4] sm:$0xf] %v737
  %800 = vst [vmem:[#allocation2 + $0x218] sm:$0xf] %v738
  %801 = vst [vmem:[%s511 + $0x20] sm:$0xf] 0
  %802 = vst [vmem:[%s511 + $0x140] sm:$0xf] 0
  %v803 = vld [vmem:[#allocation2] sm:$0xff]
  %v804 = vld [vmem:[#allocation2 + $0x8] sm:$0xff]
  %v805 = vld [vmem:[#allocation2 + $0x10] sm:$0xff]
  %v806 = vld [vmem:[#allocation2 + $0x18] sm:$0xff]
  %v807 = vld [vmem:[#allocation2 + $0x20] sm:$0xf]
  %v808 = vld [vmem:[#allocation2 + $0x24] sm:$0xff]
  %v809 = vld [vmem:[#allocation2 + $0x2c] sm:$0xff]
  %v810 = vld [vmem:[#allocation2 + $0x34] sm:$0xff]
  %v811 = vld [vmem:[#allocation2 + $0x3c] sm:$0xff]
  %v812 = vld [vmem:[#allocation2 + $0x44] sm:$0xf]
  %v813 = vld [vmem:[#allocation2 + $0x48] sm:$0xff]
  %v814 = vld [vmem:[#allocation2 + $0x50] sm:$0xff]
  %v815 = vld [vmem:[#allocation2 + $0x58] sm:$0xff]
  %v816 = vld [vmem:[#allocation2 + $0x60] sm:$0xff]
  %v817 = vld [vmem:[#allocation2 + $0x68] sm:$0xf]
  %v818 = vld [vmem:[#allocation2 + $0x6c] sm:$0xff]
  %v819 = vld [vmem:[#allocation2 + $0x74] sm:$0xff]
  %v820 = vld [vmem:[#allocation2 + $0x7c] sm:$0xff]
  %v821 = vld [vmem:[#allocation2 + $0x84] sm:$0xff]
  %v822 = vld [vmem:[#allocation2 + $0x8c] sm:$0xf]
  %v823 = vld [vmem:[#allocation2 + $0x90] sm:$0xff]
  %v824 = vld [vmem:[#allocation2 + $0x98] sm:$0xff]
  %v825 = vld [vmem:[#allocation2 + $0xa0] sm:$0xff]
  %v826 = vld [vmem:[#allocation2 + $0xa8] sm:$0xff]
  %v827 = vld [vmem:[#allocation2 + $0xb0] sm:$0xf]
  %v828 = vld [vmem:[#allocation2 + $0xb4] sm:$0xff]
  %v829 = vld [vmem:[#allocation2 + $0xbc] sm:$0xff]
  %v830 = vld [vmem:[#allocation2 + $0xc4] sm:$0xff]
  %v831 = vld [vmem:[#allocation2 + $0xcc] sm:$0xff]
  %v832 = vld [vmem:[#allocation2 + $0xd4] sm:$0xf]
  %v833 = vld [vmem:[#allocation2 + $0xd8] sm:$0xff]
  %v834 = vld [vmem:[#allocation2 + $0xe0] sm:$0xff]
  %v835 = vld [vmem:[#allocation2 + $0xe8] sm:$0xff]
  %v836 = vld [vmem:[#allocation2 + $0xf0] sm:$0xff]
  %v837 = vld [vmem:[#allocation2 + $0xf8] sm:$0xf]
  %v838 = vld [vmem:[#allocation2 + $0xfc] sm:$0xff]
  %v839 = vld [vmem:[#allocation2 + $0x104] sm:$0xff]
  %v840 = vld [vmem:[#allocation2 + $0x10c] sm:$0xff]
  %v841 = vld [vmem:[#allocation2 + $0x114] sm:$0xff]
  %v842 = vld [vmem:[#allocation2 + $0x11c] sm:$0xf]
  %v843 = vld [vmem:[#allocation2 + $0x120] sm:$0xff]
  %v844 = vld [vmem:[#allocation2 + $0x128] sm:$0xff]
  %v845 = vld [vmem:[#allocation2 + $0x130] sm:$0xff]
  %v846 = vld [vmem:[#allocation2 + $0x138] sm:$0xff]
  %v847 = vld [vmem:[#allocation2 + $0x140] sm:$0xf]
  %v848 = vld [vmem:[#allocation2 + $0x144] sm:$0xff]
  %v849 = vld [vmem:[#allocation2 + $0x14c] sm:$0xff]
  %v850 = vld [vmem:[#allocation2 + $0x154] sm:$0xff]
  %v851 = vld [vmem:[#allocation2 + $0x15c] sm:$0xff]
  %v852 = vld [vmem:[#allocation2 + $0x164] sm:$0xf]
  %v853 = vld [vmem:[#allocation2 + $0x168] sm:$0xff]
  %v854 = vld [vmem:[#allocation2 + $0x170] sm:$0xff]
  %v855 = vld [vmem:[#allocation2 + $0x178] sm:$0xff]
  %v856 = vld [vmem:[#allocation2 + $0x180] sm:$0xff]
  %v857 = vld [vmem:[#allocation2 + $0x188] sm:$0xf]
  %v858 = vld [vmem:[#allocation2 + $0x18c] sm:$0xff]
  %v859 = vld [vmem:[#allocation2 + $0x194] sm:$0xff]
  %v860 = vld [vmem:[#allocation2 + $0x19c] sm:$0xff]
  %v861 = vld [vmem:[#allocation2 + $0x1a4] sm:$0xff]
  %v862 = vld [vmem:[#allocation2 + $0x1ac] sm:$0xf]
  %v863 = vld [vmem:[#allocation2 + $0x1b0] sm:$0xff]
  %v864 = vld [vmem:[#allocation2 + $0x1b8] sm:$0xff]
  %v865 = vld [vmem:[#allocation2 + $0x1c0] sm:$0xff]
  %v866 = vld [vmem:[#allocation2 + $0x1c8] sm:$0xff]
  %v867 = vld [vmem:[#allocation2 + $0x1d0] sm:$0xf]
  %v868 = vld [vmem:[#allocation2 + $0x1d4] sm:$0xff]
  %v869 = vld [vmem:[#allocation2 + $0x1dc] sm:$0xff]
  %v870 = vld [vmem:[#allocation2 + $0x1e4] sm:$0xff]
  %v871 = vld [vmem:[#allocation2 + $0x1ec] sm:$0xff]
  %v872 = vld [vmem:[#allocation2 + $0x1f4] sm:$0xf]
  %v873 = vld [vmem:[#allocation2 + $0x1f8] sm:$0xff]
  %v874 = vld [vmem:[#allocation2 + $0x200] sm:$0xff]
  %v875 = vld [vmem:[#allocation2 + $0x208] sm:$0xff]
  %v876 = vld [vmem:[#allocation2 + $0x210] sm:$0xff]
  %v877 = vld [vmem:[#allocation2 + $0x218] sm:$0xf]
  %v878 = vld [vmem:[#allocation2 + $0x21c] sm:$0xff]
  %v879 = vld [vmem:[#allocation2 + $0x224] sm:$0xff]
  %v880 = vld [vmem:[#allocation2 + $0x22c] sm:$0xff]
  %v881 = vld [vmem:[#allocation2 + $0x234] sm:$0xff]
  %v882 = vld [vmem:[#allocation2 + $0x23c] sm:$0xf]
  %v883 = vld [vmem:[%s1] sm:$0xf]
  %v884 = vld [vmem:[%s1 + $0x4] sm:$0xf]
  %v885 = vld [vmem:[%s1 + $0x8] sm:$0xf]
  %v886 = vld [vmem:[%s1 + $0xc] sm:$0xf]
  %v887 = vld [vmem:[%s1 + $0x10] sm:$0xf]
  %v888 = vld [vmem:[%s1 + $0x14] sm:$0xf]
  %v889 = vld [vmem:[%s1 + $0x18] sm:$0xf]
  %v890 = vld [vmem:[%s1 + $0x1c] sm:$0xf]
  %v891 = vld [vmem:[%s1 + $0x20] sm:$0xf]
  %v892 = vld [vmem:[%s1 + $0x24] sm:$0xf]
  %v893 = vld [vmem:[%s1 + $0x28] sm:$0xf]
  %v894 = vld [vmem:[%s1 + $0x2c] sm:$0xf]
  %v895 = vld [vmem:[%s1 + $0x30] sm:$0xf]
  %v896 = vld [vmem:[%s1 + $0x34] sm:$0xf]
  %v897 = vld [vmem:[%s1 + $0x38] sm:$0xf]
  %v898 = vld [vmem:[%s1 + $0x3c] sm:$0xf]
  %v899 = vld [vmem:[%s1 + $0x40] sm:$0xf]
  %v900 = vld [vmem:[%s1 + $0x44] sm:$0xf]
  %v901 = vld [vmem:[%s1 + $0x48] sm:$0xf]
  %v902 = vld [vmem:[%s1 + $0x4c] sm:$0xf]
  %v903 = vld [vmem:[%s1 + $0x50] sm:$0xf]
  %v904 = vld [vmem:[%s1 + $0x54] sm:$0xf]
  %v905 = vld [vmem:[%s1 + $0x58] sm:$0xf]
  %v906 = vld [vmem:[%s1 + $0x5c] sm:$0xf]
  %v907 = vld [vmem:[%s1 + $0x60] sm:$0xf]
  %v908 = vld [vmem:[%s1 + $0x64] sm:$0xf]
  %v909 = vld [vmem:[%s1 + $0x68] sm:$0xf]
  %v910 = vld [vmem:[%s1 + $0x6c] sm:$0xf]
  %v911 = vld [vmem:[%s1 + $0x70] sm:$0xf]
  %v912 = vld [vmem:[%s1 + $0x74] sm:$0xf]
  %v913 = vld [vmem:[%s1 + $0x78] sm:$0xf]
  %v914 = vld [vmem:[%s1 + $0x7c] sm:$0xf]
  %v915 = vld [vmem:[%s1 + $0x80] sm:$0xf]
  %v916 = vld [vmem:[%s1 + $0x84] sm:$0xf]
  %v917 = vld [vmem:[%s1 + $0x88] sm:$0xf]
  %v918 = vld [vmem:[%s1 + $0x8c] sm:$0xf]
  %v919 = vld [vmem:[%s1 + $0x90] sm:$0xf]
  %v920 = vld [vmem:[%s1 + $0x94] sm:$0xf]
  %v921 = vld [vmem:[%s1 + $0x98] sm:$0xf]
  %v922 = vld [vmem:[%s1 + $0x9c] sm:$0xf]
  %v923 = vld [vmem:[%s1 + $0xa0] sm:$0xf]
  %v924 = vld [vmem:[%s1 + $0xa4] sm:$0xf]
  %v925 = vld [vmem:[%s1 + $0xa8] sm:$0xf]
  %v926 = vld [vmem:[%s1 + $0xac] sm:$0xf]
  %v927 = vld [vmem:[%s1 + $0xb0] sm:$0xf]
  %v928 = vld [vmem:[%s1 + $0xb4] sm:$0xf]
  %v929 = vld [vmem:[%s1 + $0xb8] sm:$0xf]
  %v930 = vld [vmem:[%s1 + $0xbc] sm:$0xf]
  %v931 = vld [vmem:[%s1 + $0xc0] sm:$0xf]
  %v932 = vld [vmem:[%s1 + $0xc4] sm:$0xf]
  %v933 = vld [vmem:[%s1 + $0xc8] sm:$0xf]
  %v934 = vld [vmem:[%s1 + $0xcc] sm:$0xf]
  %v935 = vld [vmem:[%s1 + $0xd0] sm:$0xf]
  %v936 = vld [vmem:[%s1 + $0xd4] sm:$0xf]
  %v937 = vld [vmem:[%s1 + $0xd8] sm:$0xf]
  %v938 = vld [vmem:[%s1 + $0xdc] sm:$0xf]
  %v939 = vld [vmem:[%s1 + $0xe0] sm:$0xf]
  %v940 = vld [vmem:[%s1 + $0xe4] sm:$0xf]
  %v941 = vld [vmem:[%s1 + $0xe8] sm:$0xf]
  %v942 = vld [vmem:[%s1 + $0xec] sm:$0xf]
  %v943 = vld [vmem:[%s1 + $0xf0] sm:$0xf]
  %v944 = vld [vmem:[%s1 + $0xf4] sm:$0xf]
  %v945 = vld [vmem:[%s1 + $0xf8] sm:$0xf]
  %v946 = vld [vmem:[%s1 + $0xfc] sm:$0xf]
  %v947 = vld [vmem:[%s1 + $0x100] sm:$0xf]
  %v948 = vld [vmem:[%s1 + $0x104] sm:$0xf]
  %v949 = vld [vmem:[%s1 + $0x108] sm:$0xf]
  %v950 = vld [vmem:[%s1 + $0x10c] sm:$0xf]
  %v951 = vld [vmem:[%s1 + $0x110] sm:$0xf]
  %v952 = vld [vmem:[%s1 + $0x114] sm:$0xf]
  %v953 = vld [vmem:[%s1 + $0x118] sm:$0xf]
  %v954 = vld [vmem:[%s1 + $0x11c] sm:$0xf]
  %v955 = vld [vmem:[%s1 + $0x120] sm:$0xf]
  %v956 = vld [vmem:[%s1 + $0x124] sm:$0xf]
  %v957 = vld [vmem:[%s1 + $0x128] sm:$0xf]
  %v958 = vld [vmem:[%s1 + $0x12c] sm:$0xf]
  %v959 = vld [vmem:[%s1 + $0x130] sm:$0xf]
  %v960 = vld [vmem:[%s1 + $0x134] sm:$0xf]
  %v961 = vld [vmem:[%s1 + $0x138] sm:$0xf]
  %v962 = vld [vmem:[%s1 + $0x13c] sm:$0xf]
  %v963 = vld [vmem:[%s1 + $0x140] sm:$0xf]
  %v964 = vld [vmem:[%s1 + $0x144] sm:$0xf]
  %v965 = vld [vmem:[%s1 + $0x148] sm:$0xf]
  %v966 = vld [vmem:[%s1 + $0x14c] sm:$0xf]
  %v967 = vld [vmem:[%s1 + $0x150] sm:$0xf]
  %v968 = vld [vmem:[%s1 + $0x154] sm:$0xf]
  %v969 = vld [vmem:[%s1 + $0x158] sm:$0xf]
  %v970 = vld [vmem:[%s1 + $0x15c] sm:$0xf]
  %v971 = vld [vmem:[%s1 + $0x160] sm:$0xf]
  %v972 = vld [vmem:[%s1 + $0x164] sm:$0xf]
  %v973 = vld [vmem:[%s1 + $0x168] sm:$0xf]
  %v974 = vld [vmem:[%s1 + $0x16c] sm:$0xf]
  %v975 = vld [vmem:[%s1 + $0x170] sm:$0xf]
  %v976 = vld [vmem:[%s1 + $0x174] sm:$0xf]
  %v977 = vld [vmem:[%s1 + $0x178] sm:$0xf]
  %v978 = vld [vmem:[%s1 + $0x17c] sm:$0xf]
  %v979 = vld [vmem:[%s1 + $0x180] sm:$0xf]
  %v980 = vld [vmem:[%s1 + $0x184] sm:$0xf]
  %v981 = vld [vmem:[%s1 + $0x188] sm:$0xf]
  %v982 = vld [vmem:[%s1 + $0x18c] sm:$0xf]
  %v983 = vld [vmem:[%s1 + $0x190] sm:$0xf]
  %v984 = vld [vmem:[%s1 + $0x194] sm:$0xf]
  %v985 = vld [vmem:[%s1 + $0x198] sm:$0xf]
  %v986 = vld [vmem:[%s1 + $0x19c] sm:$0xf]
  %v987 = vld [vmem:[%s1 + $0x1a0] sm:$0xf]
  %v988 = vld [vmem:[%s1 + $0x1a4] sm:$0xf]
  %v989 = vld [vmem:[%s1 + $0x1a8] sm:$0xf]
  %v990 = vld [vmem:[%s1 + $0x1ac] sm:$0xf]
  %v991 = vld [vmem:[%s1 + $0x1b0] sm:$0xf]
  %v992 = vld [vmem:[%s1 + $0x1b4] sm:$0xf]
  %v993 = vld [vmem:[%s1 + $0x1b8] sm:$0xf]
  %v994 = vld [vmem:[%s1 + $0x1bc] sm:$0xf]
  %v995 = vld [vmem:[%s1 + $0x1c0] sm:$0xf]
  %v996 = vld [vmem:[%s1 + $0x1c4] sm:$0xf]
  %v997 = vld [vmem:[%s1 + $0x1c8] sm:$0xf]
  %v998 = vld [vmem:[%s1 + $0x1cc] sm:$0xf]
  %v999 = vld [vmem:[%s1 + $0x1d0] sm:$0xf]
  %v1000 = vld [vmem:[%s1 + $0x1d4] sm:$0xf]
  %v1001 = vld [vmem:[%s1 + $0x1d8] sm:$0xf]
  %v1002 = vld [vmem:[%s1 + $0x1dc] sm:$0xf]
  %v1003 = vld [vmem:[%s1 + $0x1e0] sm:$0xf]
  %v1004 = vld [vmem:[%s1 + $0x1e4] sm:$0xf]
  %v1005 = vld [vmem:[%s1 + $0x1e8] sm:$0xf]
  %v1006 = vld [vmem:[%s1 + $0x1ec] sm:$0xf]
  %v1007 = vld [vmem:[%s1 + $0x1f0] sm:$0xf]
  %v1008 = vld [vmem:[%s1 + $0x1f4] sm:$0xf]
  %v1009 = vld [vmem:[%s1 + $0x1f8] sm:$0xf]
  %v1010 = vld [vmem:[%s1 + $0x1fc] sm:$0xf]
  %v1011 = vld [vmem:[%s1 + $0x200] sm:$0xf]
  %v1012 = vld [vmem:[%s1 + $0x204] sm:$0xf]
  %v1013 = vld [vmem:[%s1 + $0x208] sm:$0xf]
  %v1014 = vld [vmem:[%s1 + $0x20c] sm:$0xf]
  %v1015 = vld [vmem:[%s1 + $0x210] sm:$0xf]
  %v1016 = vld [vmem:[%s1 + $0x214] sm:$0xf]
  %v1017 = vld [vmem:[%s1 + $0x218] sm:$0xf]
  %v1018 = vld [vmem:[%s1 + $0x21c] sm:$0xf]
  %v1019 = vld [vmem:[%s1 + $0x220] sm:$0xf]
  %v1020 = vld [vmem:[%s1 + $0x224] sm:$0xf]
  %v1021 = vld [vmem:[%s1 + $0x228] sm:$0xf]
  %v1022 = vld [vmem:[%s1 + $0x22c] sm:$0xf]
  %v1023 = vld [vmem:[%s1 + $0x230] sm:$0xf]
  %v1024 = vld [vmem:[%s1 + $0x234] sm:$0xf]
  %v1025 = vld [vmem:[%s1 + $0x238] sm:$0xf]
  %v1026 = vld [vmem:[%s1 + $0x23c] sm:$0xf]
  %v1027 = vld [vmem:[%s2 + $0x3] sm:$0x1]
  %v1028 = vlaneseq
  %v1029 = vshrl.u32 %v1028, 7
  %v1030 = vsub.s32 0, %v1029
  %v1031 = vrot.slane %v1027, %v1030
  %v1112 = vunpack.c.l.b16 %v803
  %v1113 = vunpack.c.h.b16 %v803
  %v1114 = vunpack.c.l.b16 %v804
  %v1115 = vunpack.c.h.b16 %v804
  %v1116 = vunpack.c.l.b16 %v805
  %v1117 = vunpack.c.h.b16 %v805
  %v1118 = vunpack.c.l.b16 %v806
  %v1119 = vunpack.c.h.b16 %v806
  %v1120 = vunpack.c.l.b16 %v807
  %v1121 = vunpack.c.l.b16 %v808
  %v1122 = vunpack.c.h.b16 %v808
  %v1123 = vunpack.c.l.b16 %v809
  %v1124 = vunpack.c.h.b16 %v809
  %v1125 = vunpack.c.l.b16 %v810
  %v1126 = vunpack.c.h.b16 %v810
  %v1127 = vunpack.c.l.b16 %v811
  %v1128 = vunpack.c.h.b16 %v811
  %v1129 = vunpack.c.l.b16 %v812
  %v1130 = vunpack.c.l.b16 %v813
  %v1131 = vunpack.c.h.b16 %v813
  %v1132 = vunpack.c.l.b16 %v814
  %v1133 = vunpack.c.h.b16 %v814
  %v1134 = vunpack.c.l.b16 %v815
  %v1135 = vunpack.c.h.b16 %v815
  %v1136 = vunpack.c.l.b16 %v816
  %v1137 = vunpack.c.h.b16 %v816
  %v1138 = vunpack.c.l.b16 %v817
  %v1139 = vunpack.c.l.b16 %v818
  %v1140 = vunpack.c.h.b16 %v818
  %v1141 = vunpack.c.l.b16 %v819
  %v1142 = vunpack.c.h.b16 %v819
  %v1143 = vunpack.c.l.b16 %v820
  %v1144 = vunpack.c.h.b16 %v820
  %v1145 = vunpack.c.l.b16 %v821
  %v1146 = vunpack.c.h.b16 %v821
  %v1147 = vunpack.c.l.b16 %v822
  %v1148 = vunpack.c.l.b16 %v823
  %v1149 = vunpack.c.h.b16 %v823
  %v1150 = vunpack.c.l.b16 %v824
  %v1151 = vunpack.c.h.b16 %v824
  %v1152 = vunpack.c.l.b16 %v825
  %v1153 = vunpack.c.h.b16 %v825
  %v1154 = vunpack.c.l.b16 %v826
  %v1155 = vunpack.c.h.b16 %v826
  %v1156 = vunpack.c.l.b16 %v827
  %v1157 = vunpack.c.l.b16 %v828
  %v1158 = vunpack.c.h.b16 %v828
  %v1159 = vunpack.c.l.b16 %v829
  %v1160 = vunpack.c.h.b16 %v829
  %v1161 = vunpack.c.l.b16 %v830
  %v1162 = vunpack.c.h.b16 %v830
  %v1163 = vunpack.c.l.b16 %v831
  %v1164 = vunpack.c.h.b16 %v831
  %v1165 = vunpack.c.l.b16 %v832
  %v1166 = vunpack.c.l.b16 %v833
  %v1167 = vunpack.c.h.b16 %v833
  %v1168 = vunpack.c.l.b16 %v834
  %v1169 = vunpack.c.h.b16 %v834
  %v1170 = vunpack.c.l.b16 %v835
  %v1171 = vunpack.c.h.b16 %v835
  %v1172 = vunpack.c.l.b16 %v836
  %v1173 = vunpack.c.h.b16 %v836
  %v1174 = vunpack.c.l.b16 %v837
  %v1175 = vunpack.c.l.b16 %v838
  %v1176 = vunpack.c.h.b16 %v838
  %v1177 = vunpack.c.l.b16 %v839
  %v1178 = vunpack.c.h.b16 %v839
  %v1179 = vunpack.c.l.b16 %v840
  %v1180 = vunpack.c.h.b16 %v840
  %v1181 = vunpack.c.l.b16 %v841
  %v1182 = vunpack.c.h.b16 %v841
  %v1183 = vunpack.c.l.b16 %v842
  %v1184 = vunpack.c.l.b16 %v843
  %v1185 = vunpack.c.h.b16 %v843
  %v1186 = vunpack.c.l.b16 %v844
  %v1187 = vunpack.c.h.b16 %v844
  %v1188 = vunpack.c.l.b16 %v845
  %v1189 = vunpack.c.h.b16 %v845
  %v1190 = vunpack.c.l.b16 %v846
  %v1191 = vunpack.c.h.b16 %v846
  %v1192 = vunpack.c.l.b16 %v847
  %v1193 = vunpack.c.l.b16 %v848
  %v1194 = vunpack.c.h.b16 %v848
  %v1195 = vunpack.c.l.b16 %v849
  %v1196 = vunpack.c.h.b16 %v849
  %v1197 = vunpack.c.l.b16 %v850
  %v1198 = vunpack.c.h.b16 %v850
  %v1199 = vunpack.c.l.b16 %v851
  %v1200 = vunpack.c.h.b16 %v851
  %v1201 = vunpack.c.l.b16 %v852
  %v1202 = vunpack.c.l.b16 %v853
  %v1203 = vunpack.c.h.b16 %v853
  %v1204 = vunpack.c.l.b16 %v854
  %v1205 = vunpack.c.h.b16 %v854
  %v1206 = vunpack.c.l.b16 %v855
  %v1207 = vunpack.c.h.b16 %v855
  %v1208 = vunpack.c.l.b16 %v856
  %v1209 = vunpack.c.h.b16 %v856
  %v1210 = vunpack.c.l.b16 %v857
  %v1211 = vunpack.c.l.b16 %v858
  %v1212 = vunpack.c.h.b16 %v858
  %v1213 = vunpack.c.l.b16 %v859
  %v1214 = vunpack.c.h.b16 %v859
  %v1215 = vunpack.c.l.b16 %v860
  %v1216 = vunpack.c.h.b16 %v860
  %v1217 = vunpack.c.l.b16 %v861
  %v1218 = vunpack.c.h.b16 %v861
  %v1219 = vunpack.c.l.b16 %v862
  %v1220 = vunpack.c.l.b16 %v863
  %v1221 = vunpack.c.h.b16 %v863
  %v1222 = vunpack.c.l.b16 %v864
  %v1223 = vunpack.c.h.b16 %v864
  %v1224 = vunpack.c.l.b16 %v865
  %v1225 = vunpack.c.h.b16 %v865
  %v1226 = vunpack.c.l.b16 %v866
  %v1227 = vunpack.c.h.b16 %v866
  %v1228 = vunpack.c.l.b16 %v867
  %v1229 = vunpack.c.l.b16 %v868
  %v1230 = vunpack.c.h.b16 %v868
  %v1231 = vunpack.c.l.b16 %v869
  %v1232 = vunpack.c.h.b16 %v869
  %v1233 = vunpack.c.l.b16 %v870
  %v1234 = vunpack.c.h.b16 %v870
  %v1235 = vunpack.c.l.b16 %v871
  %v1236 = vunpack.c.h.b16 %v871
  %v1237 = vunpack.c.l.b16 %v872
  %v1238 = vunpack.c.l.b16 %v873
  %v1239 = vunpack.c.h.b16 %v873
  %v1240 = vunpack.c.l.b16 %v874
  %v1241 = vunpack.c.h.b16 %v874
  %v1242 = vunpack.c.l.b16 %v875
  %v1243 = vunpack.c.h.b16 %v875
  %v1244 = vunpack.c.l.b16 %v876
  %v1245 = vunpack.c.h.b16 %v876
  %v1246 = vunpack.c.l.b16 %v877
  %v1247 = vunpack.c.l.b16 %v878
  %v1248 = vunpack.c.h.b16 %v878
  %v1249 = vunpack.c.l.b16 %v879
  %v1250 = vunpack.c.h.b16 %v879
  %v1251 = vunpack.c.l.b16 %v880
  %v1252 = vunpack.c.h.b16 %v880
  %v1253 = vunpack.c.l.b16 %v881
  %v1254 = vunpack.c.h.b16 %v881
  %v1255 = vunpack.c.l.b16 %v882
  %v1256 = vpack.c.b16 %v1121, %v1112
  %v1257 = vpack.c.b16 %v1122, %v1113
  %v1258 = vpack.c.b16 %v1123, %v1114
  %v1259 = vpack.c.b16 %v1124, %v1115
  %v1260 = vpack.c.b16 %v1125, %v1116
  %v1261 = vpack.c.b16 %v1126, %v1117
  %v1262 = vpack.c.b16 %v1127, %v1118
  %v1263 = vpack.c.b16 %v1128, %v1119
  %v1264 = vpack.c.b16 %v1129, %v1120
  %v1265 = vpack.c.b16 %v1139, %v1130
  %v1266 = vpack.c.b16 %v1140, %v1131
  %v1267 = vpack.c.b16 %v1141, %v1132
  %v1268 = vpack.c.b16 %v1142, %v1133
  %v1269 = vpack.c.b16 %v1143, %v1134
  %v1270 = vpack.c.b16 %v1144, %v1135
  %v1271 = vpack.c.b16 %v1145, %v1136
  %v1272 = vpack.c.b16 %v1146, %v1137
  %v1273 = vpack.c.b16 %v1147, %v1138
  %v1274 = vpack.c.b16 %v1157, %v1148
  %v1275 = vpack.c.b16 %v1158, %v1149
  %v1276 = vpack.c.b16 %v1159, %v1150
  %v1277 = vpack.c.b16 %v1160, %v1151
  %v1278 = vpack.c.b16 %v1161, %v1152
  %v1279 = vpack.c.b16 %v1162, %v1153
  %v1280 = vpack.c.b16 %v1163, %v1154
  %v1281 = vpack.c.b16 %v1164, %v1155
  %v1282 = vpack.c.b16 %v1165, %v1156
  %v1283 = vpack.c.b16 %v1175, %v1166
  %v1284 = vpack.c.b16 %v1176, %v1167
  %v1285 = vpack.c.b16 %v1177, %v1168
  %v1286 = vpack.c.b16 %v1178, %v1169
  %v1287 = vpack.c.b16 %v1179, %v1170
  %v1288 = vpack.c.b16 %v1180, %v1171
  %v1289 = vpack.c.b16 %v1181, %v1172
  %v1290 = vpack.c.b16 %v1182, %v1173
  %v1291 = vpack.c.b16 %v1183, %v1174
  %v1292 = vpack.c.b16 %v1193, %v1184
  %v1293 = vpack.c.b16 %v1194, %v1185
  %v1294 = vpack.c.b16 %v1195, %v1186
  %v1295 = vpack.c.b16 %v1196, %v1187
  %v1296 = vpack.c.b16 %v1197, %v1188
  %v1297 = vpack.c.b16 %v1198, %v1189
  %v1298 = vpack.c.b16 %v1199, %v1190
  %v1299 = vpack.c.b16 %v1200, %v1191
  %v1300 = vpack.c.b16 %v1201, %v1192
  %v1301 = vpack.c.b16 %v1211, %v1202
  %v1302 = vpack.c.b16 %v1212, %v1203
  %v1303 = vpack.c.b16 %v1213, %v1204
  %v1304 = vpack.c.b16 %v1214, %v1205
  %v1305 = vpack.c.b16 %v1215, %v1206
  %v1306 = vpack.c.b16 %v1216, %v1207
  %v1307 = vpack.c.b16 %v1217, %v1208
  %v1308 = vpack.c.b16 %v1218, %v1209
  %v1309 = vpack.c.b16 %v1219, %v1210
  %v1310 = vpack.c.b16 %v1229, %v1220
  %v1311 = vpack.c.b16 %v1230, %v1221
  %v1312 = vpack.c.b16 %v1231, %v1222
  %v1313 = vpack.c.b16 %v1232, %v1223
  %v1314 = vpack.c.b16 %v1233, %v1224
  %v1315 = vpack.c.b16 %v1234, %v1225
  %v1316 = vpack.c.b16 %v1235, %v1226
  %v1317 = vpack.c.b16 %v1236, %v1227
  %v1318 = vpack.c.b16 %v1237, %v1228
  %v1319 = vpack.c.b16 %v1247, %v1238
  %v1320 = vpack.c.b16 %v1248, %v1239
  %v1321 = vpack.c.b16 %v1249, %v1240
  %v1322 = vpack.c.b16 %v1250, %v1241
  %v1323 = vpack.c.b16 %v1251, %v1242
  %v1324 = vpack.c.b16 %v1252, %v1243
  %v1325 = vpack.c.b16 %v1253, %v1244
  %v1326 = vpack.c.b16 %v1254, %v1245
  %v1327 = vpack.c.b16 %v1255, %v1246
  %v1544 = vunpack.c.l.b16 %v883
  %v1545 = vunpack.c.l.b16 %v884
  %v1546 = vunpack.c.l.b16 %v885
  %v1547 = vunpack.c.l.b16 %v886
  %v1548 = vunpack.c.l.b16 %v887
  %v1549 = vunpack.c.l.b16 %v888
  %v1550 = vunpack.c.l.b16 %v889
  %v1551 = vunpack.c.l.b16 %v890
  %v1552 = vunpack.c.l.b16 %v891
  %v1553 = vunpack.c.l.b16 %v892
  %v1554 = vunpack.c.l.b16 %v893
  %v1555 = vunpack.c.l.b16 %v894
  %v1556 = vunpack.c.l.b16 %v895
  %v1557 = vunpack.c.l.b16 %v896
  %v1558 = vunpack.c.l.b16 %v897
  %v1559 = vunpack.c.l.b16 %v898
  %v1560 = vunpack.c.l.b16 %v899
  %v1561 = vunpack.c.l.b16 %v900
  %v1562 = vunpack.c.l.b16 %v901
  %v1563 = vunpack.c.l.b16 %v902
  %v1564 = vunpack.c.l.b16 %v903
  %v1565 = vunpack.c.l.b16 %v904
  %v1566 = vunpack.c.l.b16 %v905
  %v1567 = vunpack.c.l.b16 %v906
  %v1568 = vunpack.c.l.b16 %v907
  %v1569 = vunpack.c.l.b16 %v908
  %v1570 = vunpack.c.l.b16 %v909
  %v1571 = vunpack.c.l.b16 %v910
  %v1572 = vunpack.c.l.b16 %v911
  %v1573 = vunpack.c.l.b16 %v912
  %v1574 = vunpack.c.l.b16 %v913
  %v1575 = vunpack.c.l.b16 %v914
  %v1576 = vunpack.c.l.b16 %v915
  %v1577 = vunpack.c.l.b16 %v916
  %v1578 = vunpack.c.l.b16 %v917
  %v1579 = vunpack.c.l.b16 %v918
  %v1580 = vunpack.c.l.b16 %v919
  %v1581 = vunpack.c.l.b16 %v920
  %v1582 = vunpack.c.l.b16 %v921
  %v1583 = vunpack.c.l.b16 %v922
  %v1584 = vunpack.c.l.b16 %v923
  %v1585 = vunpack.c.l.b16 %v924
  %v1586 = vunpack.c.l.b16 %v925
  %v1587 = vunpack.c.l.b16 %v926
  %v1588 = vunpack.c.l.b16 %v927
  %v1589 = vunpack.c.l.b16 %v928
  %v1590 = vunpack.c.l.b16 %v929
  %v1591 = vunpack.c.l.b16 %v930
  %v1592 = vunpack.c.l.b16 %v931
  %v1593 = vunpack.c.l.b16 %v932
  %v1594 = vunpack.c.l.b16 %v933
  %v1595 = vunpack.c.l.b16 %v934
  %v1596 = vunpack.c.l.b16 %v935
  %v1597 = vunpack.c.l.b16 %v936
  %v1598 = vunpack.c.l.b16 %v937
  %v1599 = vunpack.c.l.b16 %v938
  %v1600 = vunpack.c.l.b16 %v939
  %v1601 = vunpack.c.l.b16 %v940
  %v1602 = vunpack.c.l.b16 %v941
  %v1603 = vunpack.c.l.b16 %v942
  %v1604 = vunpack.c.l.b16 %v943
  %v1605 = vunpack.c.l.b16 %v944
  %v1606 = vunpack.c.l.b16 %v945
  %v1607 = vunpack.c.l.b16 %v946
  %v1608 = vunpack.c.l.b16 %v947
  %v1609 = vunpack.c.l.b16 %v948
  %v1610 = vunpack.c.l.b16 %v949
  %v1611 = vunpack.c.l.b16 %v950
  %v1612 = vunpack.c.l.b16 %v951
  %v1613 = vunpack.c.l.b16 %v952
  %v1614 = vunpack.c.l.b16 %v953
  %v1615 = vunpack.c.l.b16 %v954
  %v1616 = vunpack.c.l.b16 %v955
  %v1617 = vunpack.c.l.b16 %v956
  %v1618 = vunpack.c.l.b16 %v957
  %v1619 = vunpack.c.l.b16 %v958
  %v1620 = vunpack.c.l.b16 %v959
  %v1621 = vunpack.c.l.b16 %v960
  %v1622 = vunpack.c.l.b16 %v961
  %v1623 = vunpack.c.l.b16 %v962
  %v1624 = vunpack.c.l.b16 %v963
  %v1625 = vunpack.c.l.b16 %v964
  %v1626 = vunpack.c.l.b16 %v965
  %v1627 = vunpack.c.l.b16 %v966
  %v1628 = vunpack.c.l.b16 %v967
  %v1629 = vunpack.c.l.b16 %v968
  %v1630 = vunpack.c.l.b16 %v969
  %v1631 = vunpack.c.l.b16 %v970
  %v1632 = vunpack.c.l.b16 %v971
  %v1633 = vunpack.c.l.b16 %v972
  %v1634 = vunpack.c.l.b16 %v973
  %v1635 = vunpack.c.l.b16 %v974
  %v1636 = vunpack.c.l.b16 %v975
  %v1637 = vunpack.c.l.b16 %v976
  %v1638 = vunpack.c.l.b16 %v977
  %v1639 = vunpack.c.l.b16 %v978
  %v1640 = vunpack.c.l.b16 %v979
  %v1641 = vunpack.c.l.b16 %v980
  %v1642 = vunpack.c.l.b16 %v981
  %v1643 = vunpack.c.l.b16 %v982
  %v1644 = vunpack.c.l.b16 %v983
  %v1645 = vunpack.c.l.b16 %v984
  %v1646 = vunpack.c.l.b16 %v985
  %v1647 = vunpack.c.l.b16 %v986
  %v1648 = vunpack.c.l.b16 %v987
  %v1649 = vunpack.c.l.b16 %v988
  %v1650 = vunpack.c.l.b16 %v989
  %v1651 = vunpack.c.l.b16 %v990
  %v1652 = vunpack.c.l.b16 %v991
  %v1653 = vunpack.c.l.b16 %v992
  %v1654 = vunpack.c.l.b16 %v993
  %v1655 = vunpack.c.l.b16 %v994
  %v1656 = vunpack.c.l.b16 %v995
  %v1657 = vunpack.c.l.b16 %v996
  %v1658 = vunpack.c.l.b16 %v997
  %v1659 = vunpack.c.l.b16 %v998
  %v1660 = vunpack.c.l.b16 %v999
  %v1661 = vunpack.c.l.b16 %v1000
  %v1662 = vunpack.c.l.b16 %v1001
  %v1663 = vunpack.c.l.b16 %v1002
  %v1664 = vunpack.c.l.b16 %v1003
  %v1665 = vunpack.c.l.b16 %v1004
  %v1666 = vunpack.c.l.b16 %v1005
  %v1667 = vunpack.c.l.b16 %v1006
  %v1668 = vunpack.c.l.b16 %v1007
  %v1669 = vunpack.c.l.b16 %v1008
  %v1670 = vunpack.c.l.b16 %v1009
  %v1671 = vunpack.c.l.b16 %v1010
  %v1672 = vunpack.c.l.b16 %v1011
  %v1673 = vunpack.c.l.b16 %v1012
  %v1674 = vunpack.c.l.b16 %v1013
  %v1675 = vunpack.c.l.b16 %v1014
  %v1676 = vunpack.c.l.b16 %v1015
  %v1677 = vunpack.c.l.b16 %v1016
  %v1678 = vunpack.c.l.b16 %v1017
  %v1679 = vunpack.c.l.b16 %v1018
  %v1680 = vunpack.c.l.b16 %v1019
  %v1681 = vunpack.c.l.b16 %v1020
  %v1682 = vunpack.c.l.b16 %v1021
  %v1683 = vunpack.c.l.b16 %v1022
  %v1684 = vunpack.c.l.b16 %v1023
  %v1685 = vunpack.c.l.b16 %v1024
  %v1686 = vunpack.c.l.b16 %v1025
  %v1687 = vunpack.c.l.b16 %v1026
  %v1688 = vpack.c.b16 %v1545, %v1544
  %v1689 = vpack.c.b16 %v1547, %v1546
  %v1690 = vpack.c.b16 %v1549, %v1548
  %v1691 = vpack.c.b16 %v1551, %v1550
  %v1692 = vpack.c.b16 %v1553, %v1552
  %v1693 = vpack.c.b16 %v1555, %v1554
  %v1694 = vpack.c.b16 %v1557, %v1556
  %v1695 = vpack.c.b16 %v1559, %v1558
  %v1696 = vpack.c.b16 %v1561, %v1560
  %v1697 = vpack.c.b16 %v1563, %v1562
  %v1698 = vpack.c.b16 %v1565, %v1564
  %v1699 = vpack.c.b16 %v1567, %v1566
  %v1700 = vpack.c.b16 %v1569, %v1568
  %v1701 = vpack.c.b16 %v1571, %v1570
  %v1702 = vpack.c.b16 %v1573, %v1572
  %v1703 = vpack.c.b16 %v1575, %v1574
  %v1704 = vpack.c.b16 %v1577, %v1576
  %v1705 = vpack.c.b16 %v1579, %v1578
  %v1706 = vpack.c.b16 %v1581, %v1580
  %v1707 = vpack.c.b16 %v1583, %v1582
  %v1708 = vpack.c.b16 %v1585, %v1584
  %v1709 = vpack.c.b16 %v1587, %v1586
  %v1710 = vpack.c.b16 %v1589, %v1588
  %v1711 = vpack.c.b16 %v1591, %v1590
  %v1712 = vpack.c.b16 %v1593, %v1592
  %v1713 = vpack.c.b16 %v1595, %v1594
  %v1714 = vpack.c.b16 %v1597, %v1596
  %v1715 = vpack.c.b16 %v1599, %v1598
  %v1716 = vpack.c.b16 %v1601, %v1600
  %v1717 = vpack.c.b16 %v1603, %v1602
  %v1718 = vpack.c.b16 %v1605, %v1604
  %v1719 = vpack.c.b16 %v1607, %v1606
  %v1720 = vpack.c.b16 %v1609, %v1608
  %v1721 = vpack.c.b16 %v1611, %v1610
  %v1722 = vpack.c.b16 %v1613, %v1612
  %v1723 = vpack.c.b16 %v1615, %v1614
  %v1724 = vpack.c.b16 %v1617, %v1616
  %v1725 = vpack.c.b16 %v1619, %v1618
  %v1726 = vpack.c.b16 %v1621, %v1620
  %v1727 = vpack.c.b16 %v1623, %v1622
  %v1728 = vpack.c.b16 %v1625, %v1624
  %v1729 = vpack.c.b16 %v1627, %v1626
  %v1730 = vpack.c.b16 %v1629, %v1628
  %v1731 = vpack.c.b16 %v1631, %v1630
  %v1732 = vpack.c.b16 %v1633, %v1632
  %v1733 = vpack.c.b16 %v1635, %v1634
  %v1734 = vpack.c.b16 %v1637, %v1636
  %v1735 = vpack.c.b16 %v1639, %v1638
  %v1736 = vpack.c.b16 %v1641, %v1640
  %v1737 = vpack.c.b16 %v1643, %v1642
  %v1738 = vpack.c.b16 %v1645, %v1644
  %v1739 = vpack.c.b16 %v1647, %v1646
  %v1740 = vpack.c.b16 %v1649, %v1648
  %v1741 = vpack.c.b16 %v1651, %v1650
  %v1742 = vpack.c.b16 %v1653, %v1652
  %v1743 = vpack.c.b16 %v1655, %v1654
  %v1744 = vpack.c.b16 %v1657, %v1656
  %v1745 = vpack.c.b16 %v1659, %v1658
  %v1746 = vpack.c.b16 %v1661, %v1660
  %v1747 = vpack.c.b16 %v1663, %v1662
  %v1748 = vpack.c.b16 %v1665, %v1664
  %v1749 = vpack.c.b16 %v1667, %v1666
  %v1750 = vpack.c.b16 %v1669, %v1668
  %v1751 = vpack.c.b16 %v1671, %v1670
  %v1752 = vpack.c.b16 %v1673, %v1672
  %v1753 = vpack.c.b16 %v1675, %v1674
  %v1754 = vpack.c.b16 %v1677, %v1676
  %v1755 = vpack.c.b16 %v1679, %v1678
  %v1756 = vpack.c.b16 %v1681, %v1680
  %v1757 = vpack.c.b16 %v1683, %v1682
  %v1758 = vpack.c.b16 %v1685, %v1684
  %v1759 = vpack.c.b16 %v1687, %v1686
  %1832 = vmatprep.subr.bf16.mxu0 0
  %1833 = vmatpush1.bf16.msra.mxu0 %v1695
  %1834 = vmatprep.subr.bf16.mxu0 0
  %1835 = vmatpush1.bf16.msra.mxu0 %v1694
  %1836 = vmatprep.subr.bf16.mxu0 0
  %1837 = vmatpush1.bf16.msra.mxu0 %v1693
  %1838 = vmatprep.subr.bf16.mxu0 0
  %1839 = vmatpush1.bf16.msra.mxu0 %v1692
  %1840 = vmatprep.subr.bf16.mxu0 0
  %1841 = vmatpush1.bf16.msra.mxu0 %v1691
  %1842 = vmatprep.subr.bf16.mxu0 0
  %1843 = vmatpush1.bf16.msra.mxu0 %v1690
  %1844 = vmatprep.subr.bf16.mxu0 0
  %1845 = vmatpush1.bf16.msra.mxu0 %v1689
  %1846 = vmatprep.subr.bf16.mxu0 0
  %1847 = vmatpush1.bf16.msra.mxu0 %v1688
  %1848 = vmatprep.subr.bf16.mxu0 0
  %1849 = vmatpush2.bf16.msra.mxu0 %v1703
  %1850 = vmatprep.subr.bf16.mxu0 0
  %1851 = vmatpush2.bf16.msra.mxu0 %v1702
  %1852 = vmatprep.subr.bf16.mxu0 0
  %1853 = vmatpush2.bf16.msra.mxu0 %v1701
  %1854 = vmatprep.subr.bf16.mxu0 0
  %1855 = vmatpush2.bf16.msra.mxu0 %v1700
  %1856 = vmatprep.subr.bf16.mxu0 0
  %1857 = vmatpush2.bf16.msra.mxu0 %v1699
  %1858 = vmatprep.subr.bf16.mxu0 0
  %1859 = vmatpush2.bf16.msra.mxu0 %v1698
  %1860 = vmatprep.subr.bf16.mxu0 0
  %1861 = vmatpush2.bf16.msra.mxu0 %v1697
  %1862 = vmatprep.subr.bf16.mxu0 0
  %1863 = vmatpush2.bf16.msra.mxu0 %v1696
  %1864 = vmatprep.mubr.bf16.mxu0 %v1257
  %1865 = vmatmul.mubr.bf16.gmra.mxu0 %v1256
  %v1866 = vpop.f32.mrf.mxu0
  %v1867 = vadd.f32 %v1031, %v1866
  %v1868 = vpop.f32.mrf.mxu0
  %v1869 = vpop.f32.mrf.mxu0
  %v1870 = vadd.f32 %v1031, %v1869
  %v1871 = vpop.f32.mrf.mxu0
  %1872 = vmatprep.mubr.bf16.mxu0 %v1266
  %1873 = vmatmul.mubr.bf16.gmra.mxu0 %v1265
  %v1874 = vpop.f32.mrf.mxu0
  %v1875 = vadd.f32 %v1031, %v1874
  %v1876 = vpop.f32.mrf.mxu0
  %v1877 = vpop.f32.mrf.mxu0
  %v1878 = vadd.f32 %v1031, %v1877
  %v1879 = vpop.f32.mrf.mxu0
  %1880 = vmatprep.mubr.bf16.mxu0 %v1275
  %1881 = vmatmul.mubr.bf16.gmra.mxu0 %v1274
  %v1882 = vpop.f32.mrf.mxu0
  %v1883 = vadd.f32 %v1031, %v1882
  %v1884 = vpop.f32.mrf.mxu0
  %v1885 = vpop.f32.mrf.mxu0
  %v1886 = vadd.f32 %v1031, %v1885
  %v1887 = vpop.f32.mrf.mxu0
  %1888 = vmatprep.mubr.bf16.mxu0 %v1284
  %1889 = vmatmul.mubr.bf16.gmra.mxu0 %v1283
  %v1890 = vpop.f32.mrf.mxu0
  %v1891 = vadd.f32 %v1031, %v1890
  %v1892 = vpop.f32.mrf.mxu0
  %v1893 = vpop.f32.mrf.mxu0
  %v1894 = vadd.f32 %v1031, %v1893
  %v1895 = vpop.f32.mrf.mxu0
  %1896 = vmatprep.mubr.bf16.mxu0 %v1293
  %1897 = vmatmul.mubr.bf16.gmra.mxu0 %v1292
  %v1898 = vpop.f32.mrf.mxu0
  %v1899 = vadd.f32 %v1031, %v1898
  %v1900 = vpop.f32.mrf.mxu0
  %v1901 = vpop.f32.mrf.mxu0
  %v1902 = vadd.f32 %v1031, %v1901
  %v1903 = vpop.f32.mrf.mxu0
  %1904 = vmatprep.mubr.bf16.mxu0 %v1302
  %1905 = vmatmul.mubr.bf16.gmra.mxu0 %v1301
  %v1906 = vpop.f32.mrf.mxu0
  %v1907 = vadd.f32 %v1031, %v1906
  %v1908 = vpop.f32.mrf.mxu0
  %v1909 = vpop.f32.mrf.mxu0
  %v1910 = vadd.f32 %v1031, %v1909
  %v1911 = vpop.f32.mrf.mxu0
  %1912 = vmatprep.mubr.bf16.mxu0 %v1311
  %1913 = vmatmul.mubr.bf16.gmra.mxu0 %v1310
  %v1914 = vpop.f32.mrf.mxu0
  %v1915 = vadd.f32 %v1031, %v1914
  %v1916 = vpop.f32.mrf.mxu0
  %v1917 = vpop.f32.mrf.mxu0
  %v1918 = vadd.f32 %v1031, %v1917
  %v1919 = vpop.f32.mrf.mxu0
  %1920 = vmatprep.mubr.bf16.mxu0 %v1320
  %1921 = vmatmul.mubr.bf16.gmra.mxu0 %v1319
  %v1922 = vpop.f32.mrf.mxu0
  %v1923 = vadd.f32 %v1031, %v1922
  %v1924 = vpop.f32.mrf.mxu0
  %v1925 = vpop.f32.mrf.mxu0
  %v1926 = vadd.f32 %v1031, %v1925
  %v1927 = vpop.f32.mrf.mxu0
  %1928 = vdwg.mxu0
  %1929 = vmatprep.subr.bf16.mxu0 0
  %1930 = vmatpush1.bf16.msra.mxu0 %v1711
  %1931 = vmatprep.subr.bf16.mxu0 0
  %1932 = vmatpush1.bf16.msra.mxu0 %v1710
  %1933 = vmatprep.subr.bf16.mxu0 0
  %1934 = vmatpush1.bf16.msra.mxu0 %v1709
  %1935 = vmatprep.subr.bf16.mxu0 0
  %1936 = vmatpush1.bf16.msra.mxu0 %v1708
  %1937 = vmatprep.subr.bf16.mxu0 0
  %1938 = vmatpush1.bf16.msra.mxu0 %v1707
  %1939 = vmatprep.subr.bf16.mxu0 0
  %1940 = vmatpush1.bf16.msra.mxu0 %v1706
  %1941 = vmatprep.subr.bf16.mxu0 0
  %1942 = vmatpush1.bf16.msra.mxu0 %v1705
  %1943 = vmatprep.subr.bf16.mxu0 0
  %1944 = vmatpush1.bf16.msra.mxu0 %v1704
  %1945 = vmatprep.subr.bf16.mxu0 0
  %1946 = vmatpush2.bf16.msra.mxu0 %v1719
  %1947 = vmatprep.subr.bf16.mxu0 0
  %1948 = vmatpush2.bf16.msra.mxu0 %v1718
  %1949 = vmatprep.subr.bf16.mxu0 0
  %1950 = vmatpush2.bf16.msra.mxu0 %v1717
  %1951 = vmatprep.subr.bf16.mxu0 0
  %1952 = vmatpush2.bf16.msra.mxu0 %v1716
  %1953 = vmatprep.subr.bf16.mxu0 0
  %1954 = vmatpush2.bf16.msra.mxu0 %v1715
  %1955 = vmatprep.subr.bf16.mxu0 0
  %1956 = vmatpush2.bf16.msra.mxu0 %v1714
  %1957 = vmatprep.subr.bf16.mxu0 0
  %1958 = vmatpush2.bf16.msra.mxu0 %v1713
  %1959 = vmatprep.subr.bf16.mxu0 0
  %1960 = vmatpush2.bf16.msra.mxu0 %v1712
  %1961 = vmatprep.mubr.bf16.mxu0 %v1259
  %1962 = vmatmul.mubr.bf16.gmra.mxu0 %v1258
  %v1963 = vpop.f32.mrf.mxu0
  %v1964 = vadd.f32 %v1867, %v1963
  %v1965 = vpop.f32.mrf.mxu0
  %v1966 = vpop.f32.mrf.mxu0
  %v1967 = vadd.f32 %v1870, %v1966
  %v1968 = vpop.f32.mrf.mxu0
  %1969 = vmatprep.mubr.bf16.mxu0 %v1268
  %1970 = vmatmul.mubr.bf16.gmra.mxu0 %v1267
  %v1971 = vpop.f32.mrf.mxu0
  %v1972 = vadd.f32 %v1875, %v1971
  %v1973 = vpop.f32.mrf.mxu0
  %v1974 = vpop.f32.mrf.mxu0
  %v1975 = vadd.f32 %v1878, %v1974
  %v1976 = vpop.f32.mrf.mxu0
  %1977 = vmatprep.mubr.bf16.mxu0 %v1277
  %1978 = vmatmul.mubr.bf16.gmra.mxu0 %v1276
  %v1979 = vpop.f32.mrf.mxu0
  %v1980 = vadd.f32 %v1883, %v1979
  %v1981 = vpop.f32.mrf.mxu0
  %v1982 = vpop.f32.mrf.mxu0
  %v1983 = vadd.f32 %v1886, %v1982
  %v1984 = vpop.f32.mrf.mxu0
  %1985 = vmatprep.mubr.bf16.mxu0 %v1286
  %1986 = vmatmul.mubr.bf16.gmra.mxu0 %v1285
  %v1987 = vpop.f32.mrf.mxu0
  %v1988 = vadd.f32 %v1891, %v1987
  %v1989 = vpop.f32.mrf.mxu0
  %v1990 = vpop.f32.mrf.mxu0
  %v1991 = vadd.f32 %v1894, %v1990
  %v1992 = vpop.f32.mrf.mxu0
  %1993 = vmatprep.mubr.bf16.mxu0 %v1295
  %1994 = vmatmul.mubr.bf16.gmra.mxu0 %v1294
  %v1995 = vpop.f32.mrf.mxu0
  %v1996 = vadd.f32 %v1899, %v1995
  %v1997 = vpop.f32.mrf.mxu0
  %v1998 = vpop.f32.mrf.mxu0
  %v1999 = vadd.f32 %v1902, %v1998
  %v2000 = vpop.f32.mrf.mxu0
  %2001 = vmatprep.mubr.bf16.mxu0 %v1304
  %2002 = vmatmul.mubr.bf16.gmra.mxu0 %v1303
  %v2003 = vpop.f32.mrf.mxu0
  %v2004 = vadd.f32 %v1907, %v2003
  %v2005 = vpop.f32.mrf.mxu0
  %v2006 = vpop.f32.mrf.mxu0
  %v2007 = vadd.f32 %v1910, %v2006
  %v2008 = vpop.f32.mrf.mxu0
  %2009 = vmatprep.mubr.bf16.mxu0 %v1313
  %2010 = vmatmul.mubr.bf16.gmra.mxu0 %v1312
  %v2011 = vpop.f32.mrf.mxu0
  %v2012 = vadd.f32 %v1915, %v2011
  %v2013 = vpop.f32.mrf.mxu0
  %v2014 = vpop.f32.mrf.mxu0
  %v2015 = vadd.f32 %v1918, %v2014
  %v2016 = vpop.f32.mrf.mxu0
  %2017 = vmatprep.mubr.bf16.mxu0 %v1322
  %2018 = vmatmul.mubr.bf16.gmra.mxu0 %v1321
  %v2019 = vpop.f32.mrf.mxu0
  %v2020 = vadd.f32 %v1923, %v2019
  %v2021 = vpop.f32.mrf.mxu0
  %v2022 = vpop.f32.mrf.mxu0
  %v2023 = vadd.f32 %v1926, %v2022
  %v2024 = vpop.f32.mrf.mxu0
  %2025 = vdwg.mxu0
  %2026 = vmatprep.subr.bf16.mxu0 0
  %2027 = vmatpush1.bf16.msra.mxu0 %v1727
  %2028 = vmatprep.subr.bf16.mxu0 0
  %2029 = vmatpush1.bf16.msra.mxu0 %v1726
  %2030 = vmatprep.subr.bf16.mxu0 0
  %2031 = vmatpush1.bf16.msra.mxu0 %v1725
  %2032 = vmatprep.subr.bf16.mxu0 0
  %2033 = vmatpush1.bf16.msra.mxu0 %v1724
  %2034 = vmatprep.subr.bf16.mxu0 0
  %2035 = vmatpush1.bf16.msra.mxu0 %v1723
  %2036 = vmatprep.subr.bf16.mxu0 0
  %2037 = vmatpush1.bf16.msra.mxu0 %v1722
  %2038 = vmatprep.subr.bf16.mxu0 0
  %2039 = vmatpush1.bf16.msra.mxu0 %v1721
  %2040 = vmatprep.subr.bf16.mxu0 0
  %2041 = vmatpush1.bf16.msra.mxu0 %v1720
  %2042 = vmatprep.subr.bf16.mxu0 0
  %2043 = vmatpush2.bf16.msra.mxu0 %v1735
  %2044 = vmatprep.subr.bf16.mxu0 0
  %2045 = vmatpush2.bf16.msra.mxu0 %v1734
  %2046 = vmatprep.subr.bf16.mxu0 0
  %2047 = vmatpush2.bf16.msra.mxu0 %v1733
  %2048 = vmatprep.subr.bf16.mxu0 0
  %2049 = vmatpush2.bf16.msra.mxu0 %v1732
  %2050 = vmatprep.subr.bf16.mxu0 0
  %2051 = vmatpush2.bf16.msra.mxu0 %v1731
  %2052 = vmatprep.subr.bf16.mxu0 0
  %2053 = vmatpush2.bf16.msra.mxu0 %v1730
  %2054 = vmatprep.subr.bf16.mxu0 0
  %2055 = vmatpush2.bf16.msra.mxu0 %v1729
  %2056 = vmatprep.subr.bf16.mxu0 0
  %2057 = vmatpush2.bf16.msra.mxu0 %v1728
  %2058 = vmatprep.mubr.bf16.mxu0 %v1261
  %2059 = vmatmul.mubr.bf16.gmra.mxu0 %v1260
  %v2060 = vpop.f32.mrf.mxu0
  %v2061 = vadd.f32 %v1964, %v2060
  %v2062 = vpop.f32.mrf.mxu0
  %v2063 = vpop.f32.mrf.mxu0
  %v2064 = vadd.f32 %v1967, %v2063
  %v2065 = vpop.f32.mrf.mxu0
  %2066 = vmatprep.mubr.bf16.mxu0 %v1270
  %2067 = vmatmul.mubr.bf16.gmra.mxu0 %v1269
  %v2068 = vpop.f32.mrf.mxu0
  %v2069 = vadd.f32 %v1972, %v2068
  %v2070 = vpop.f32.mrf.mxu0
  %v2071 = vpop.f32.mrf.mxu0
  %v2072 = vadd.f32 %v1975, %v2071
  %v2073 = vpop.f32.mrf.mxu0
  %2074 = vmatprep.mubr.bf16.mxu0 %v1279
  %2075 = vmatmul.mubr.bf16.gmra.mxu0 %v1278
  %v2076 = vpop.f32.mrf.mxu0
  %v2077 = vadd.f32 %v1980, %v2076
  %v2078 = vpop.f32.mrf.mxu0
  %v2079 = vpop.f32.mrf.mxu0
  %v2080 = vadd.f32 %v1983, %v2079
  %v2081 = vpop.f32.mrf.mxu0
  %2082 = vmatprep.mubr.bf16.mxu0 %v1288
  %2083 = vmatmul.mubr.bf16.gmra.mxu0 %v1287
  %v2084 = vpop.f32.mrf.mxu0
  %v2085 = vadd.f32 %v1988, %v2084
  %v2086 = vpop.f32.mrf.mxu0
  %v2087 = vpop.f32.mrf.mxu0
  %v2088 = vadd.f32 %v1991, %v2087
  %v2089 = vpop.f32.mrf.mxu0
  %2090 = vmatprep.mubr.bf16.mxu0 %v1297
  %2091 = vmatmul.mubr.bf16.gmra.mxu0 %v1296
  %v2092 = vpop.f32.mrf.mxu0
  %v2093 = vadd.f32 %v1996, %v2092
  %v2094 = vpop.f32.mrf.mxu0
  %v2095 = vpop.f32.mrf.mxu0
  %v2096 = vadd.f32 %v1999, %v2095
  %v2097 = vpop.f32.mrf.mxu0
  %2098 = vmatprep.mubr.bf16.mxu0 %v1306
  %2099 = vmatmul.mubr.bf16.gmra.mxu0 %v1305
  %v2100 = vpop.f32.mrf.mxu0
  %v2101 = vadd.f32 %v2004, %v2100
  %v2102 = vpop.f32.mrf.mxu0
  %v2103 = vpop.f32.mrf.mxu0
  %v2104 = vadd.f32 %v2007, %v2103
  %v2105 = vpop.f32.mrf.mxu0
  %2106 = vmatprep.mubr.bf16.mxu0 %v1315
  %2107 = vmatmul.mubr.bf16.gmra.mxu0 %v1314
  %v2108 = vpop.f32.mrf.mxu0
  %v2109 = vadd.f32 %v2012, %v2108
  %v2110 = vpop.f32.mrf.mxu0
  %v2111 = vpop.f32.mrf.mxu0
  %v2112 = vadd.f32 %v2015, %v2111
  %v2113 = vpop.f32.mrf.mxu0
  %2114 = vmatprep.mubr.bf16.mxu0 %v1324
  %2115 = vmatmul.mubr.bf16.gmra.mxu0 %v1323
  %v2116 = vpop.f32.mrf.mxu0
  %v2117 = vadd.f32 %v2020, %v2116
  %v2118 = vpop.f32.mrf.mxu0
  %v2119 = vpop.f32.mrf.mxu0
  %v2120 = vadd.f32 %v2023, %v2119
  %v2121 = vpop.f32.mrf.mxu0
  %2122 = vdwg.mxu0
  %2123 = vmatprep.subr.bf16.mxu0 0
  %2124 = vmatpush1.bf16.msra.mxu0 %v1743
  %2125 = vmatprep.subr.bf16.mxu0 0
  %2126 = vmatpush1.bf16.msra.mxu0 %v1742
  %2127 = vmatprep.subr.bf16.mxu0 0
  %2128 = vmatpush1.bf16.msra.mxu0 %v1741
  %2129 = vmatprep.subr.bf16.mxu0 0
  %2130 = vmatpush1.bf16.msra.mxu0 %v1740
  %2131 = vmatprep.subr.bf16.mxu0 0
  %2132 = vmatpush1.bf16.msra.mxu0 %v1739
  %2133 = vmatprep.subr.bf16.mxu0 0
  %2134 = vmatpush1.bf16.msra.mxu0 %v1738
  %2135 = vmatprep.subr.bf16.mxu0 0
  %2136 = vmatpush1.bf16.msra.mxu0 %v1737
  %2137 = vmatprep.subr.bf16.mxu0 0
  %2138 = vmatpush1.bf16.msra.mxu0 %v1736
  %2139 = vmatprep.subr.bf16.mxu0 0
  %2140 = vmatpush2.bf16.msra.mxu0 %v1751
  %2141 = vmatprep.subr.bf16.mxu0 0
  %2142 = vmatpush2.bf16.msra.mxu0 %v1750
  %2143 = vmatprep.subr.bf16.mxu0 0
  %2144 = vmatpush2.bf16.msra.mxu0 %v1749
  %2145 = vmatprep.subr.bf16.mxu0 0
  %2146 = vmatpush2.bf16.msra.mxu0 %v1748
  %2147 = vmatprep.subr.bf16.mxu0 0
  %2148 = vmatpush2.bf16.msra.mxu0 %v1747
  %2149 = vmatprep.subr.bf16.mxu0 0
  %2150 = vmatpush2.bf16.msra.mxu0 %v1746
  %2151 = vmatprep.subr.bf16.mxu0 0
  %2152 = vmatpush2.bf16.msra.mxu0 %v1745
  %2153 = vmatprep.subr.bf16.mxu0 0
  %2154 = vmatpush2.bf16.msra.mxu0 %v1744
  %2155 = vmatprep.mubr.bf16.mxu0 %v1263
  %2156 = vmatmul.mubr.bf16.gmra.mxu0 %v1262
  %v2157 = vpop.f32.mrf.mxu0
  %v2158 = vadd.f32 %v2061, %v2157
  %v2159 = vpop.f32.mrf.mxu0
  %v2160 = vpop.f32.mrf.mxu0
  %v2161 = vadd.f32 %v2064, %v2160
  %v2162 = vpop.f32.mrf.mxu0
  %2163 = vmatprep.mubr.bf16.mxu0 %v1272
  %2164 = vmatmul.mubr.bf16.gmra.mxu0 %v1271
  %v2165 = vpop.f32.mrf.mxu0
  %v2166 = vadd.f32 %v2069, %v2165
  %v2167 = vpop.f32.mrf.mxu0
  %v2168 = vpop.f32.mrf.mxu0
  %v2169 = vadd.f32 %v2072, %v2168
  %v2170 = vpop.f32.mrf.mxu0
  %2171 = vmatprep.mubr.bf16.mxu0 %v1281
  %2172 = vmatmul.mubr.bf16.gmra.mxu0 %v1280
  %v2173 = vpop.f32.mrf.mxu0
  %v2174 = vadd.f32 %v2077, %v2173
  %v2175 = vpop.f32.mrf.mxu0
  %v2176 = vpop.f32.mrf.mxu0
  %v2177 = vadd.f32 %v2080, %v2176
  %v2178 = vpop.f32.mrf.mxu0
  %2179 = vmatprep.mubr.bf16.mxu0 %v1290
  %2180 = vmatmul.mubr.bf16.gmra.mxu0 %v1289
  %v2181 = vpop.f32.mrf.mxu0
  %v2182 = vadd.f32 %v2085, %v2181
  %v2183 = vpop.f32.mrf.mxu0
  %v2184 = vpop.f32.mrf.mxu0
  %v2185 = vadd.f32 %v2088, %v2184
  %v2186 = vpop.f32.mrf.mxu0
  %2187 = vmatprep.mubr.bf16.mxu0 %v1299
  %2188 = vmatmul.mubr.bf16.gmra.mxu0 %v1298
  %v2189 = vpop.f32.mrf.mxu0
  %v2190 = vadd.f32 %v2093, %v2189
  %v2191 = vpop.f32.mrf.mxu0
  %v2192 = vpop.f32.mrf.mxu0
  %v2193 = vadd.f32 %v2096, %v2192
  %v2194 = vpop.f32.mrf.mxu0
  %2195 = vmatprep.mubr.bf16.mxu0 %v1308
  %2196 = vmatmul.mubr.bf16.gmra.mxu0 %v1307
  %v2197 = vpop.f32.mrf.mxu0
  %v2198 = vadd.f32 %v2101, %v2197
  %v2199 = vpop.f32.mrf.mxu0
  %v2200 = vpop.f32.mrf.mxu0
  %v2201 = vadd.f32 %v2104, %v2200
  %v2202 = vpop.f32.mrf.mxu0
  %2203 = vmatprep.mubr.bf16.mxu0 %v1317
  %2204 = vmatmul.mubr.bf16.gmra.mxu0 %v1316
  %v2205 = vpop.f32.mrf.mxu0
  %v2206 = vadd.f32 %v2109, %v2205
  %v2207 = vpop.f32.mrf.mxu0
  %v2208 = vpop.f32.mrf.mxu0
  %v2209 = vadd.f32 %v2112, %v2208
  %v2210 = vpop.f32.mrf.mxu0
  %2211 = vmatprep.mubr.bf16.mxu0 %v1326
  %2212 = vmatmul.mubr.bf16.gmra.mxu0 %v1325
  %v2213 = vpop.f32.mrf.mxu0
  %v2214 = vadd.f32 %v2117, %v2213
  %v2215 = vpop.f32.mrf.mxu0
  %v2216 = vpop.f32.mrf.mxu0
  %v2217 = vadd.f32 %v2120, %v2216
  %v2218 = vpop.f32.mrf.mxu0
  %2219 = vdwg.mxu0
  %2220 = vmatprep.subr.bf16.mxu0 0
  %2221 = vmatpush1.bf16.msra.mxu0 %v1759
  %2222 = vmatprep.subr.bf16.mxu0 0
  %2223 = vmatpush1.bf16.msra.mxu0 %v1758
  %2224 = vmatprep.subr.bf16.mxu0 0
  %2225 = vmatpush1.bf16.msra.mxu0 %v1757
  %2226 = vmatprep.subr.bf16.mxu0 0
  %2227 = vmatpush1.bf16.msra.mxu0 %v1756
  %2228 = vmatprep.subr.bf16.mxu0 0
  %2229 = vmatpush1.bf16.msra.mxu0 %v1755
  %2230 = vmatprep.subr.bf16.mxu0 0
  %2231 = vmatpush1.bf16.msra.mxu0 %v1754
  %2232 = vmatprep.subr.bf16.mxu0 0
  %2233 = vmatpush1.bf16.msra.mxu0 %v1753
  %2234 = vmatprep.subr.bf16.mxu0 0
  %2235 = vmatpush1.bf16.msra.mxu0 %v1752
  %2236 = vmatprep.subr.bf16.mxu0 0
  %2237 = vmatpush2.bf16.msra.mxu0 0
  %2238 = vmatprep.subr.bf16.mxu0 0
  %2239 = vmatpush2.bf16.msra.mxu0 0
  %2240 = vmatprep.subr.bf16.mxu0 0
  %2241 = vmatpush2.bf16.msra.mxu0 0
  %2242 = vmatprep.subr.bf16.mxu0 0
  %2243 = vmatpush2.bf16.msra.mxu0 0
  %2244 = vmatprep.subr.bf16.mxu0 0
  %2245 = vmatpush2.bf16.msra.mxu0 0
  %2246 = vmatprep.subr.bf16.mxu0 0
  %2247 = vmatpush2.bf16.msra.mxu0 0
  %2248 = vmatprep.subr.bf16.mxu0 0
  %2249 = vmatpush2.bf16.msra.mxu0 0
  %2250 = vmatprep.subr.bf16.mxu0 0
  %2251 = vmatpush2.bf16.msra.mxu0 0
  %2252 = vmatprep.mubr.bf16.mxu0 0
  %2253 = vmatmul.mubr.bf16.gmra.mxu0 %v1264
  %v2254 = vpop.f32.mrf.mxu0
  %v2255 = vadd.f32 %v2158, %v2254
  %v2256 = vpop.f32.mrf.mxu0
  %v2257 = vpop.f32.mrf.mxu0
  %v2258 = vadd.f32 %v2161, %v2257
  %v2259 = vpop.f32.mrf.mxu0
  %2260 = vmatprep.mubr.bf16.mxu0 0
  %2261 = vmatmul.mubr.bf16.gmra.mxu0 %v1273
  %v2262 = vpop.f32.mrf.mxu0
  %v2263 = vadd.f32 %v2166, %v2262
  %v2264 = vpop.f32.mrf.mxu0
  %v2265 = vpop.f32.mrf.mxu0
  %v2266 = vadd.f32 %v2169, %v2265
  %v2267 = vpop.f32.mrf.mxu0
  %2268 = vmatprep.mubr.bf16.mxu0 0
  %2269 = vmatmul.mubr.bf16.gmra.mxu0 %v1282
  %v2270 = vpop.f32.mrf.mxu0
  %v2271 = vadd.f32 %v2174, %v2270
  %v2272 = vpop.f32.mrf.mxu0
  %v2273 = vpop.f32.mrf.mxu0
  %v2274 = vadd.f32 %v2177, %v2273
  %v2275 = vpop.f32.mrf.mxu0
  %2276 = vmatprep.mubr.bf16.mxu0 0
  %2277 = vmatmul.mubr.bf16.gmra.mxu0 %v1291
  %v2278 = vpop.f32.mrf.mxu0
  %v2279 = vadd.f32 %v2182, %v2278
  %v2280 = vpop.f32.mrf.mxu0
  %v2281 = vpop.f32.mrf.mxu0
  %v2282 = vadd.f32 %v2185, %v2281
  %v2283 = vpop.f32.mrf.mxu0
  %2284 = vmatprep.mubr.bf16.mxu0 0
  %2285 = vmatmul.mubr.bf16.gmra.mxu0 %v1300
  %v2286 = vpop.f32.mrf.mxu0
  %v2287 = vadd.f32 %v2190, %v2286
  %v2288 = vpop.f32.mrf.mxu0
  %v2289 = vpop.f32.mrf.mxu0
  %v2290 = vadd.f32 %v2193, %v2289
  %v2291 = vpop.f32.mrf.mxu0
  %2292 = vmatprep.mubr.bf16.mxu0 0
  %2293 = vmatmul.mubr.bf16.gmra.mxu0 %v1309
  %v2294 = vpop.f32.mrf.mxu0
  %v2295 = vadd.f32 %v2198, %v2294
  %v2296 = vpop.f32.mrf.mxu0
  %v2297 = vpop.f32.mrf.mxu0
  %v2298 = vadd.f32 %v2201, %v2297
  %v2299 = vpop.f32.mrf.mxu0
  %2300 = vmatprep.mubr.bf16.mxu0 0
  %2301 = vmatmul.mubr.bf16.gmra.mxu0 %v1318
  %v2302 = vpop.f32.mrf.mxu0
  %v2303 = vadd.f32 %v2206, %v2302
  %v2304 = vpop.f32.mrf.mxu0
  %v2305 = vpop.f32.mrf.mxu0
  %v2306 = vadd.f32 %v2209, %v2305
  %v2307 = vpop.f32.mrf.mxu0
  %2308 = vmatprep.mubr.bf16.mxu0 0
  %2309 = vmatmul.mubr.bf16.gmra.mxu0 %v1327
  %v2310 = vpop.f32.mrf.mxu0
  %v2311 = vadd.f32 %v2214, %v2310
  %v2312 = vpop.f32.mrf.mxu0
  %v2313 = vpop.f32.mrf.mxu0
  %v2314 = vadd.f32 %v2217, %v2313
  %v2315 = vpop.f32.mrf.mxu0
  %2316 = vdwg.mxu0
  %v2317 = vld [vmem:[%s0] sm:$0xff]
  %v2318 = vld [vmem:[%s0 + $0x8] sm:$0xff]
  %v2319 = vld [vmem:[%s0 + $0x10] sm:$0xff]
  %v2320 = vld [vmem:[%s0 + $0x18] sm:$0xff]
  %v2321 = vld [vmem:[%s0 + $0x20] sm:$0xff]
  %v2322 = vld [vmem:[%s0 + $0x28] sm:$0xff]
  %v2323 = vld [vmem:[%s0 + $0x30] sm:$0xff]
  %v2324 = vld [vmem:[%s0 + $0x38] sm:$0xff]
  %v2325 = vld [vmem:[%s0 + $0x40] sm:$0xff]
  %v2326 = vld [vmem:[%s0 + $0x48] sm:$0xff]
  %v2327 = vld [vmem:[%s0 + $0x50] sm:$0xff]
  %v2328 = vld [vmem:[%s0 + $0x58] sm:$0xff]
  %v2329 = vld [vmem:[%s0 + $0x60] sm:$0xff]
  %v2330 = vld [vmem:[%s0 + $0x68] sm:$0xff]
  %v2331 = vld [vmem:[%s0 + $0x70] sm:$0xff]
  %v2332 = vld [vmem:[%s0 + $0x78] sm:$0xff]
  %v2333 = vadd.f32 %v2255, %v2317
  %v2334 = vadd.f32 %v2258, %v2318
  %v2335 = vadd.f32 %v2263, %v2319
  %v2336 = vadd.f32 %v2266, %v2320
  %v2337 = vadd.f32 %v2271, %v2321
  %v2338 = vadd.f32 %v2274, %v2322
  %v2339 = vadd.f32 %v2279, %v2323
  %v2340 = vadd.f32 %v2282, %v2324
  %v2341 = vadd.f32 %v2287, %v2325
  %v2342 = vadd.f32 %v2290, %v2326
  %v2343 = vadd.f32 %v2295, %v2327
  %v2344 = vadd.f32 %v2298, %v2328
  %v2345 = vadd.f32 %v2303, %v2329
  %v2346 = vadd.f32 %v2306, %v2330
  %v2347 = vadd.f32 %v2311, %v2331
  %v2348 = vadd.f32 %v2314, %v2332
  %2349 = vst [vmem:[%s3] sm:$0xff] %v2333
  %2350 = vst [vmem:[%s3 + $0x8] sm:$0xff] %v2334
  %2351 = vst [vmem:[%s3 + $0x10] sm:$0xff] %v2335
  %2352 = vst [vmem:[%s3 + $0x18] sm:$0xff] %v2336
  %2353 = vst [vmem:[%s3 + $0x20] sm:$0xff] %v2337
  %2354 = vst [vmem:[%s3 + $0x28] sm:$0xff] %v2338
  %2355 = vst [vmem:[%s3 + $0x30] sm:$0xff] %v2339
  %2356 = vst [vmem:[%s3 + $0x38] sm:$0xff] %v2340
  %2357 = vst [vmem:[%s3 + $0x40] sm:$0xff] %v2341
  %2358 = vst [vmem:[%s3 + $0x48] sm:$0xff] %v2342
  %2359 = vst [vmem:[%s3 + $0x50] sm:$0xff] %v2343
  %2360 = vst [vmem:[%s3 + $0x58] sm:$0xff] %v2344
  %2361 = vst [vmem:[%s3 + $0x60] sm:$0xff] %v2345
  %2362 = vst [vmem:[%s3 + $0x68] sm:$0xff] %v2346
  %2363 = vst [vmem:[%s3 + $0x70] sm:$0xff] %v2347
  %2364 = vst [vmem:[%s3 + $0x78] sm:$0xff] %v2348
  // Predicated region
  $region14: #{run.1} parent=0 // pred_check
    _
  $region15: #{run.1} parent=0 // pred_check_branch
    %2366 = sbr.rel (0) target = $region17
  $region16: #{run.1} parent=0 // pred_region
    _
  $region17: #{run.1} parent=0 // pred_fallthru
    _
  // Predicated region
  $region18: #{run.1} parent=0 // pred_check
    _
  $region19: #{run.1} parent=0 // pred_check_branch
    %2368 = sbr.rel (0) target = $region21
  $region20: #{run.1} parent=0 // pred_region
    _
  $region21: #{run.1} parent=0 // pred_fallthru
    _

</llo_original>
